<compile_context>
chip_gen: v7x
topology: tpu7x:2x2x1
jax: 0.10.0
libtpu: 0.0.40
codegen_flags: <defaults>
</compile_context>

<pallas_src>
import functools

import jax
import jax.numpy as jnp
import numpy as np
from jax.experimental import pallas as pl
from jax.experimental.pallas import tpu as pltpu

LANE = 128
SUBLANE = 8


def _round_up(n, m):
    return ((n + m - 1) // m) * m


def gru_kernel(x_ref, w_ih_ref, w_hh_ref, b_gi_ref, b_hn_ref, h_ref, gi_ref,
               *, batch, time_block, seq_len, hidden_pad, mask_tail):
    """One grid step == one TB-long block of the GRU recurrence.

    x_ref    : (TB*B, I)     time-major input slab, time-flattened into rows
    w_ih_ref : (I, 3*Hp)     gate-aligned fused [r|z|n] input->hidden weights
    w_hh_ref : (Hp, 3*Hp)    gate-aligned fused hidden->hidden weights
    b_gi_ref : (1, 3*Hp)     b_ih + [b_hh_r, b_hh_z, 0] (gate-aligned, zero pad)
    b_hn_ref : (1, Hp)       b_hh_n (applied inside the r gate, as in PyTorch)
    h_ref    : (B, Hp)       output block == running hidden state (constant
                             block index -> resident in VMEM across the grid)
    gi_ref   : (TB*B, 3*Hp)  VMEM scratch for the hoisted input gates
    """
    tb = pl.program_id(0)
    B = batch
    TB = time_block
    Hp = hidden_pad

    @pl.when(tb == 0)
    def _():
        h_ref[...] = jnp.zeros_like(h_ref)

    # --- Hoisted off the serial chain: one big MXU push for the whole slab
    #     (M = TB*B) instead of TB tiny M=B pushes inside the loop; bias
    #     folded here once per grid step. ---
    gi_ref[...] = (
        jnp.dot(x_ref[...], w_ih_ref[...], preferred_element_type=jnp.float32)
        + b_gi_ref[...])

    w_hh = w_hh_ref[...]
    # Hoisted bias broadcast (JAX does not CSE broadcast_in_dim; leaving it in
    # step() would emit one broadcast per unrolled iteration on the VPU).
    b_hn = jnp.broadcast_to(b_hn_ref[...], (B, Hp))

    def step(t, h):
        row = pl.multiple_of(t * B, SUBLANE)
        gi = gi_ref[pl.ds(row, B), :]                                # (B, 3Hp)
        gh = jnp.dot(h, w_hh, preferred_element_type=jnp.float32)    # (B, 3Hp)
        # Gate slices are 128-lane aligned -> pure per-lane VPU/EUP work.
        r = jax.nn.sigmoid(gi[:, :Hp] + gh[:, :Hp])
        z = jax.nn.sigmoid(gi[:, Hp:2 * Hp] + gh[:, Hp:2 * Hp])
        n = jnp.tanh(gi[:, 2 * Hp:] + r * (gh[:, 2 * Hp:] + b_hn))
        h_new = (1.0 - z) * n + z * h
        if mask_tail:
            # Zero-padded tail time steps (S padded up to a multiple of TB):
            # keep h unchanged.  Scalar predicate -> cheap select.
            h_new = jnp.where(tb * TB + t < seq_len, h_new, h)
        return h_new

    # Hidden state stays in vregs across the block; one VMEM read/write of
    # (B, Hp) per grid step only.  Capped unroll keeps bundle count and vreg
    # live ranges bounded while still giving the LLO scheduler room.
    h = jax.lax.fori_loop(0, TB, step, h_ref[...], unroll=min(TB, 8))
    h_ref[...] = h


def _pack_gate_cols(w, H, Hp):
    """(rows, 3H) -> (rows, 3*Hp): each gate block zero-padded to Hp lanes."""
    pad = ((0, 0), (0, Hp - H))
    return jnp.concatenate(
        [jnp.pad(w[:, g * H:(g + 1) * H], pad) for g in range(3)], axis=1)


def gru_model_forward(x, params):
    """x: [batch, seq_len, input_size] -> [batch, output_size]."""
    w_ih, w_hh, b_ih, b_hh, w_fc, b_fc = params
    B, S, I = x.shape
    H = w_hh.shape[0]
    Hp = _round_up(H, LANE)          # gate block width / padded hidden (128)
    B_pad = _round_up(B, SUBLANE)    # full sublane tiles, no masked stores

    # --- Gate-aligned, zero-padded weight/bias packing (padded cols/rows are
    #     exactly zero so padded hidden lanes stay zero). ---
    w_ih_p = _pack_gate_cols(w_ih.astype(jnp.float32), H, Hp)         # (I, 3Hp)
    w_hh_p = jnp.pad(_pack_gate_cols(w_hh.astype(jnp.float32), H, Hp),
                     ((0, Hp - H), (0, 0)))                           # (Hp, 3Hp)
    # PyTorch GRU keeps b_hh_n inside the r gate; fold the rest into b_gi.
    b_gi = b_ih + jnp.concatenate(
        [b_hh[:, :2 * H], jnp.zeros((1, H), jnp.float32)], axis=1)    # (1, 3H)
    b_gi_p = _pack_gate_cols(b_gi.astype(jnp.float32), H, Hp)         # (1, 3Hp)
    b_hn_p = jnp.pad(b_hh[:, 2 * H:].astype(jnp.float32),
                     ((0, 0), (0, Hp - H)))                           # (1, Hp)

    # --- Time-major input, batch padded to sublanes, time padded to TB. ---
    TB = min(S, 32)
    S_pad = _round_up(S, TB)
    x_t = jnp.transpose(x, (1, 0, 2)).astype(jnp.float32)             # (S, B, I)
    x_t = jnp.pad(x_t, ((0, S_pad - S), (0, B_pad - B), (0, 0)))
    # Flatten (time, batch) -> rows so the kernel sees a plain 2-D slab and
    # needs no in-kernel reshape for the hoisted matmul.
    x_flat = x_t.reshape(S_pad * B_pad, I)

    grid = (S_pad // TB,)
    kernel = functools.partial(
        gru_kernel,
        batch=B_pad, time_block=TB, seq_len=S, hidden_pad=Hp,
        mask_tail=(S_pad != S))

    h_last = pl.pallas_call(
        kernel,
        out_shape=jax.ShapeDtypeStruct((B_pad, Hp), jnp.float32),
        grid_spec=pltpu.PrefetchScalarGridSpec(
            num_scalar_prefetch=0,
            grid=grid,
            in_specs=[
                pl.BlockSpec((TB * B_pad, I), lambda t: (t, 0)),      # x slab
                pl.BlockSpec((I, 3 * Hp), lambda t: (0, 0)),          # W_ih
                pl.BlockSpec((Hp, 3 * Hp), lambda t: (0, 0)),         # W_hh
                pl.BlockSpec((1, 3 * Hp), lambda t: (0, 0)),          # b_gi
                pl.BlockSpec((1, Hp), lambda t: (0, 0)),              # b_hh_n
            ],
            out_specs=pl.BlockSpec((B_pad, Hp), lambda t: (0, 0)),    # h carry
            scratch_shapes=[pltpu.VMEM((TB * B_pad, 3 * Hp), jnp.float32)],
        ),
        compiler_params=pltpu.CompilerParams(
            dimension_semantics=("arbitrary",),   # sequential recurrence
        ),
    )(x_flat, w_ih_p, w_hh_p, b_gi_p, b_hn_p)

    # Final Linear (O=1 is lane-sparse; keep it outside the kernel).
    return h_last[:B, :H] @ w_fc + b_fc


def init_params(key, input_size, hidden_size, output_size):
    """Deterministic init mirroring PyTorch's uniform(-1/sqrt(H), 1/sqrt(H)).

    Fused gate layout: [r | z | n] along the 3H axis (unpadded; the wrapper
    does the lane-aligned packing).
    """
    ks = jax.random.split(key, 6)
    bound = 1.0 / np.sqrt(hidden_size)
    u = lambda k, shape: jax.random.uniform(
        k, shape, dtype=jnp.float32, minval=-bound, maxval=bound)
    w_ih = u(ks[0], (input_size, 3 * hidden_size))
    w_hh = u(ks[1], (hidden_size, 3 * hidden_size))
    b_ih = u(ks[2], (1, 3 * hidden_size))
    b_hh = u(ks[3], (1, 3 * hidden_size))
    w_fc = u(ks[4], (hidden_size, output_size))
    b_fc = u(ks[5], (1, output_size))
    return (w_ih, w_hh, b_ih, b_hh, w_fc, b_fc)


def gru_model_reference(x, params):
    """Pure-JAX reference of the same GRU + Linear forward (for verification)."""
    w_ih, w_hh, b_ih, b_hh, w_fc, b_fc = params
    B, S, I = x.shape
    H = w_hh.shape[0]
    h0 = jnp.zeros((B, H), jnp.float32)

    def step(h, x_t):
        gi = x_t @ w_ih + b_ih
        gh = h @ w_hh + b_hh
        r = jax.nn.sigmoid(gi[:, :H] + gh[:, :H])
        z = jax.nn.sigmoid(gi[:, H:2 * H] + gh[:, H:2 * H])
        n = jnp.tanh(gi[:, 2 * H:] + r * gh[:, 2 * H:])
        h_new = (1.0 - z) * n + z * h
        return h_new, None

    h_last, _ = jax.lax.scan(step, h0, jnp.transpose(x, (1, 0, 2)))
    return h_last @ w_fc + b_fc


if __name__ == "__main__":
    batch, seq_len = 2, 8
    input_size, hidden_size, output_size = 4, 32, 1

    key = jax.random.PRNGKey(0)
    k_x, k_p = jax.random.split(key)
    x = jax.random.normal(k_x, (batch, seq_len, input_size), dtype=jnp.float32)
    params = init_params(k_p, input_size, hidden_size, output_size)

    out = jax.block_until_ready(gru_model_forward(x, params))
    ref = jax.block_until_ready(gru_model_reference(x, params))

    assert out.shape == (batch, output_size)
    np.testing.assert_allclose(np.asarray(out), np.asarray(ref), rtol=1e-5, atol=1e-5)

    print("KERNEL_OK")
</pallas_src>

<mosaic_0001>
module attributes {stable_mosaic.version = 11 : i64} {
  func.func @gru_kernel(%arg0: i32, %arg1: memref<64x4xf32, #tpu.memory_space<vmem>>, %arg2: memref<4x384xf32, #tpu.memory_space<vmem>>, %arg3: memref<128x384xf32, #tpu.memory_space<vmem>>, %arg4: memref<1x384xf32, #tpu.memory_space<vmem>>, %arg5: memref<1x128xf32, #tpu.memory_space<vmem>>, %arg6: memref<8x128xf32, #tpu.memory_space<vmem>>, %arg7: memref<64x384xf32, #tpu.memory_space<vmem>>) attributes {dimension_semantics = [#tpu.dimension_semantics<arbitrary>], iteration_bounds = array<i64: 1>, scalar_prefetch = 0 : i64, scratch_operands = 1 : i64, tpu.core_type = #tpu.core_type<tc>, window_params = [{transform_indices = @transform_0, window_bounds = array<i64: 64, 4>}, {pipeline_mode = #tpu.pipeline_mode<synchronous>, transform_indices = @transform_1, window_bounds = array<i64: 4, 384>}, {pipeline_mode = #tpu.pipeline_mode<synchronous>, transform_indices = @transform_2, window_bounds = array<i64: 128, 384>}, {pipeline_mode = #tpu.pipeline_mode<synchronous>, transform_indices = @transform_3, window_bounds = array<i64: 1, 384>}, {pipeline_mode = #tpu.pipeline_mode<synchronous>, transform_indices = @transform_4, window_bounds = array<i64: 1, 128>}, {pipeline_mode = #tpu.pipeline_mode<synchronous>, transform_indices = @transform_5, window_bounds = array<i64: 8, 128>}]} {
    %c0_i32 = arith.constant 0 : i32
    %0 = arith.cmpi eq, %arg0, %c0_i32 : i32
    %1 = arith.extui %0 : i1 to i32
    %c0_i32_0 = arith.constant 0 : i32
    %2 = arith.cmpi ne, %1, %c0_i32_0 : i32
    scf.if %2 {
      %cst_65 = arith.constant 0.000000e+00 : f32
      %272 = vector.broadcast %cst_65 : f32 to vector<8x128xf32>
      %c0_66 = arith.constant 0 : index
      %c0_67 = arith.constant 0 : index
      %273 = vector.load %arg6[%c0_66, %c0_67] : memref<8x128xf32, #tpu.memory_space<vmem>>, vector<8x128xf32>
      tpu.vector_store %arg6[%c0_66, %c0_67], %272 {strides = array<i32>} : memref<8x128xf32, #tpu.memory_space<vmem>>, vector<8x128xf32>,
    } else {
    }
    %c0 = arith.constant 0 : index
    %c0_1 = arith.constant 0 : index
    %3 = vector.load %arg1[%c0, %c0_1] : memref<64x4xf32, #tpu.memory_space<vmem>>, vector<64x4xf32>
    %c0_2 = arith.constant 0 : index
    %c0_3 = arith.constant 0 : index
    %4 = vector.load %arg2[%c0_2, %c0_3] : memref<4x384xf32, #tpu.memory_space<vmem>>, vector<4x384xf32>
    %cst = arith.constant dense<0.000000e+00> : vector<64x384xf32>
    %5 = tpu.matmul %3, %4, %cst {dimension_numbers = #tpu.dot_dimension_numbers<[1], [0], [0], [1], [0, 0, 1, 1], [], []>} : vector<64x4xf32>, vector<4x384xf32>, vector<64x384xf32> -> vector<64x384xf32>
    %c0_4 = arith.constant 0 : index
    %c0_5 = arith.constant 0 : index
    %6 = vector.load %arg4[%c0_4, %c0_5] : memref<1x384xf32, #tpu.memory_space<vmem>>, vector<1x384xf32>
    %7 = vector.broadcast %6 : vector<1x384xf32> to vector<64x384xf32>
    %8 = arith.addf %5, %7 : vector<64x384xf32>
    %c0_6 = arith.constant 0 : index
    %c0_7 = arith.constant 0 : index
    %9 = vector.load %arg7[%c0_6, %c0_7] : memref<64x384xf32, #tpu.memory_space<vmem>>, vector<64x384xf32>
    tpu.vector_store %arg7[%c0_6, %c0_7], %8 {strides = array<i32>} : memref<64x384xf32, #tpu.memory_space<vmem>>, vector<64x384xf32>,
    %c0_8 = arith.constant 0 : index
    %c0_9 = arith.constant 0 : index
    %10 = vector.load %arg3[%c0_8, %c0_9] : memref<128x384xf32, #tpu.memory_space<vmem>>, vector<128x384xf32>
    %c0_10 = arith.constant 0 : index
    %c0_11 = arith.constant 0 : index
    %11 = vector.load %arg5[%c0_10, %c0_11] : memref<1x128xf32, #tpu.memory_space<vmem>>, vector<1x128xf32>
    %12 = vector.shape_cast %11 : vector<1x128xf32> to vector<1x128xf32>
    %13 = vector.broadcast %12 : vector<1x128xf32> to vector<8x128xf32>
    %c0_12 = arith.constant 0 : index
    %c0_13 = arith.constant 0 : index
    %14 = vector.load %arg6[%c0_12, %c0_13] : memref<8x128xf32, #tpu.memory_space<vmem>>, vector<8x128xf32>
    %c0_i32_14 = arith.constant 0 : i32
    %c8_i32 = arith.constant 8 : i32
    %15 = arith.muli %c0_i32_14, %c8_i32 : i32
    %16 = tpu.assume_multiple %15, 8 : i32
    %17 = arith.index_cast %16 : i32 to index
    %c0_15 = arith.constant 0 : index
    %18 = vector.load %arg7[%17, %c0_15] : memref<64x384xf32, #tpu.memory_space<vmem>>, vector<8x384xf32>
    %cst_16 = arith.constant dense<0.000000e+00> : vector<8x384xf32>
    %19 = tpu.matmul %14, %10, %cst_16 {dimension_numbers = #tpu.dot_dimension_numbers<[1], [0], [0], [1], [0, 0, 1, 1], [], []>} : vector<8x128xf32>, vector<128x384xf32>, vector<8x384xf32> -> vector<8x384xf32>
    %20 = vector.extract_strided_slice %18 {offsets = [0, 0], sizes = [8, 128], strides = [1, 1]} : vector<8x384xf32> to vector<8x128xf32>
    %21 = vector.extract_strided_slice %19 {offsets = [0, 0], sizes = [8, 128], strides = [1, 1]} : vector<8x384xf32> to vector<8x128xf32>
    %22 = arith.addf %20, %21 : vector<8x128xf32>
    %23 = arith.negf %22 : vector<8x128xf32>
    %24 = math.exp %23 : vector<8x128xf32>
    %cst_17 = arith.constant 1.000000e+00 : f32
    %25 = vector.broadcast %cst_17 : f32 to vector<8x128xf32>
    %26 = arith.addf %25, %24 : vector<8x128xf32>
    %27 = arith.divf %25, %26 : vector<8x128xf32>
    %28 = vector.extract_strided_slice %18 {offsets = [0, 128], sizes = [8, 128], strides = [1, 1]} : vector<8x384xf32> to vector<8x128xf32>
    %29 = vector.extract_strided_slice %19 {offsets = [0, 128], sizes = [8, 128], strides = [1, 1]} : vector<8x384xf32> to vector<8x128xf32>
    %30 = arith.addf %28, %29 : vector<8x128xf32>
    %31 = arith.negf %30 : vector<8x128xf32>
    %32 = math.exp %31 : vector<8x128xf32>
    %cst_18 = arith.constant 1.000000e+00 : f32
    %33 = vector.broadcast %cst_18 : f32 to vector<8x128xf32>
    %34 = arith.addf %33, %32 : vector<8x128xf32>
    %35 = arith.divf %33, %34 : vector<8x128xf32>
    %36 = vector.extract_strided_slice %18 {offsets = [0, 256], sizes = [8, 128], strides = [1, 1]} : vector<8x384xf32> to vector<8x128xf32>
    %37 = vector.extract_strided_slice %19 {offsets = [0, 256], sizes = [8, 128], strides = [1, 1]} : vector<8x384xf32> to vector<8x128xf32>
    %38 = arith.addf %37, %13 : vector<8x128xf32>
    %39 = arith.mulf %27, %38 : vector<8x128xf32>
    %40 = arith.addf %36, %39 : vector<8x128xf32>
    %41 = math.tanh %40 : vector<8x128xf32>
    %cst_19 = arith.constant 1.000000e+00 : f32
    %42 = vector.broadcast %cst_19 : f32 to vector<8x128xf32>
    %43 = arith.subf %42, %35 : vector<8x128xf32>
    %44 = arith.mulf %43, %41 : vector<8x128xf32>
    %45 = arith.mulf %35, %14 : vector<8x128xf32>
    %46 = arith.addf %44, %45 : vector<8x128xf32>
    %c1_i32 = arith.constant 1 : i32
    %c8_i32_20 = arith.constant 8 : i32
    %47 = arith.muli %c1_i32, %c8_i32_20 : i32
    %48 = tpu.assume_multiple %47, 8 : i32
    %49 = arith.index_cast %48 : i32 to index
    %c0_21 = arith.constant 0 : index
    %50 = vector.load %arg7[%49, %c0_21] : memref<64x384xf32, #tpu.memory_space<vmem>>, vector<8x384xf32>
    %cst_22 = arith.constant dense<0.000000e+00> : vector<8x384xf32>
    %51 = tpu.matmul %46, %10, %cst_22 {dimension_numbers = #tpu.dot_dimension_numbers<[1], [0], [0], [1], [0, 0, 1, 1], [], []>} : vector<8x128xf32>, vector<128x384xf32>, vector<8x384xf32> -> vector<8x384xf32>
    %52 = vector.extract_strided_slice %50 {offsets = [0, 0], sizes = [8, 128], strides = [1, 1]} : vector<8x384xf32> to vector<8x128xf32>
    %53 = vector.extract_strided_slice %51 {offsets = [0, 0], sizes = [8, 128], strides = [1, 1]} : vector<8x384xf32> to vector<8x128xf32>
    %54 = arith.addf %52, %53 : vector<8x128xf32>
    %55 = arith.negf %54 : vector<8x128xf32>
    %56 = math.exp %55 : vector<8x128xf32>
    %cst_23 = arith.constant 1.000000e+00 : f32
    %57 = vector.broadcast %cst_23 : f32 to vector<8x128xf32>
    %58 = arith.addf %57, %56 : vector<8x128xf32>
    %59 = arith.divf %57, %58 : vector<8x128xf32>
    %60 = vector.extract_strided_slice %50 {offsets = [0, 128], sizes = [8, 128], strides = [1, 1]} : vector<8x384xf32> to vector<8x128xf32>
    %61 = vector.extract_strided_slice %51 {offsets = [0, 128], sizes = [8, 128], strides = [1, 1]} : vector<8x384xf32> to vector<8x128xf32>
    %62 = arith.addf %60, %61 : vector<8x128xf32>
    %63 = arith.negf %62 : vector<8x128xf32>
    %64 = math.exp %63 : vector<8x128xf32>
    %cst_24 = arith.constant 1.000000e+00 : f32
    %65 = vector.broadcast %cst_24 : f32 to vector<8x128xf32>
    %66 = arith.addf %65, %64 : vector<8x128xf32>
    %67 = arith.divf %65, %66 : vector<8x128xf32>
    %68 = vector.extract_strided_slice %50 {offsets = [0, 256], sizes = [8, 128], strides = [1, 1]} : vector<8x384xf32> to vector<8x128xf32>
    %69 = vector.extract_strided_slice %51 {offsets = [0, 256], sizes = [8, 128], strides = [1, 1]} : vector<8x384xf32> to vector<8x128xf32>
    %70 = arith.addf %69, %13 : vector<8x128xf32>
    %71 = arith.mulf %59, %70 : vector<8x128xf32>
    %72 = arith.addf %68, %71 : vector<8x128xf32>
    %73 = math.tanh %72 : vector<8x128xf32>
    %cst_25 = arith.constant 1.000000e+00 : f32
    %74 = vector.broadcast %cst_25 : f32 to vector<8x128xf32>
    %75 = arith.subf %74, %67 : vector<8x128xf32>
    %76 = arith.mulf %75, %73 : vector<8x128xf32>
    %77 = arith.mulf %67, %46 : vector<8x128xf32>
    %78 = arith.addf %76, %77 : vector<8x128xf32>
    %c2_i32 = arith.constant 2 : i32
    %c8_i32_26 = arith.constant 8 : i32
    %79 = arith.muli %c2_i32, %c8_i32_26 : i32
    %80 = tpu.assume_multiple %79, 8 : i32
    %81 = arith.index_cast %80 : i32 to index
    %c0_27 = arith.constant 0 : index
    %82 = vector.load %arg7[%81, %c0_27] : memref<64x384xf32, #tpu.memory_space<vmem>>, vector<8x384xf32>
    %cst_28 = arith.constant dense<0.000000e+00> : vector<8x384xf32>
    %83 = tpu.matmul %78, %10, %cst_28 {dimension_numbers = #tpu.dot_dimension_numbers<[1], [0], [0], [1], [0, 0, 1, 1], [], []>} : vector<8x128xf32>, vector<128x384xf32>, vector<8x384xf32> -> vector<8x384xf32>
    %84 = vector.extract_strided_slice %82 {offsets = [0, 0], sizes = [8, 128], strides = [1, 1]} : vector<8x384xf32> to vector<8x128xf32>
    %85 = vector.extract_strided_slice %83 {offsets = [0, 0], sizes = [8, 128], strides = [1, 1]} : vector<8x384xf32> to vector<8x128xf32>
    %86 = arith.addf %84, %85 : vector<8x128xf32>
    %87 = arith.negf %86 : vector<8x128xf32>
    %88 = math.exp %87 : vector<8x128xf32>
    %cst_29 = arith.constant 1.000000e+00 : f32
    %89 = vector.broadcast %cst_29 : f32 to vector<8x128xf32>
    %90 = arith.addf %89, %88 : vector<8x128xf32>
    %91 = arith.divf %89, %90 : vector<8x128xf32>
    %92 = vector.extract_strided_slice %82 {offsets = [0, 128], sizes = [8, 128], strides = [1, 1]} : vector<8x384xf32> to vector<8x128xf32>
    %93 = vector.extract_strided_slice %83 {offsets = [0, 128], sizes = [8, 128], strides = [1, 1]} : vector<8x384xf32> to vector<8x128xf32>
    %94 = arith.addf %92, %93 : vector<8x128xf32>
    %95 = arith.negf %94 : vector<8x128xf32>
    %96 = math.exp %95 : vector<8x128xf32>
    %cst_30 = arith.constant 1.000000e+00 : f32
    %97 = vector.broadcast %cst_30 : f32 to vector<8x128xf32>
    %98 = arith.addf %97, %96 : vector<8x128xf32>
    %99 = arith.divf %97, %98 : vector<8x128xf32>
    %100 = vector.extract_strided_slice %82 {offsets = [0, 256], sizes = [8, 128], strides = [1, 1]} : vector<8x384xf32> to vector<8x128xf32>
    %101 = vector.extract_strided_slice %83 {offsets = [0, 256], sizes = [8, 128], strides = [1, 1]} : vector<8x384xf32> to vector<8x128xf32>
    %102 = arith.addf %101, %13 : vector<8x128xf32>
    %103 = arith.mulf %91, %102 : vector<8x128xf32>
    %104 = arith.addf %100, %103 : vector<8x128xf32>
    %105 = math.tanh %104 : vector<8x128xf32>
    %cst_31 = arith.constant 1.000000e+00 : f32
    %106 = vector.broadcast %cst_31 : f32 to vector<8x128xf32>
    %107 = arith.subf %106, %99 : vector<8x128xf32>
    %108 = arith.mulf %107, %105 : vector<8x128xf32>
    %109 = arith.mulf %99, %78 : vector<8x128xf32>
    %110 = arith.addf %108, %109 : vector<8x128xf32>
    %c3_i32 = arith.constant 3 : i32
    %c8_i32_32 = arith.constant 8 : i32
    %111 = arith.muli %c3_i32, %c8_i32_32 : i32
    %112 = tpu.assume_multiple %111, 8 : i32
    %113 = arith.index_cast %112 : i32 to index
    %c0_33 = arith.constant 0 : index
    %114 = vector.load %arg7[%113, %c0_33] : memref<64x384xf32, #tpu.memory_space<vmem>>, vector<8x384xf32>
    %cst_34 = arith.constant dense<0.000000e+00> : vector<8x384xf32>
    %115 = tpu.matmul %110, %10, %cst_34 {dimension_numbers = #tpu.dot_dimension_numbers<[1], [0], [0], [1], [0, 0, 1, 1], [], []>} : vector<8x128xf32>, vector<128x384xf32>, vector<8x384xf32> -> vector<8x384xf32>
    %116 = vector.extract_strided_slice %114 {offsets = [0, 0], sizes = [8, 128], strides = [1, 1]} : vector<8x384xf32> to vector<8x128xf32>
    %117 = vector.extract_strided_slice %115 {offsets = [0, 0], sizes = [8, 128], strides = [1, 1]} : vector<8x384xf32> to vector<8x128xf32>
    %118 = arith.addf %116, %117 : vector<8x128xf32>
    %119 = arith.negf %118 : vector<8x128xf32>
    %120 = math.exp %119 : vector<8x128xf32>
    %cst_35 = arith.constant 1.000000e+00 : f32
    %121 = vector.broadcast %cst_35 : f32 to vector<8x128xf32>
    %122 = arith.addf %121, %120 : vector<8x128xf32>
    %123 = arith.divf %121, %122 : vector<8x128xf32>
    %124 = vector.extract_strided_slice %114 {offsets = [0, 128], sizes = [8, 128], strides = [1, 1]} : vector<8x384xf32> to vector<8x128xf32>
    %125 = vector.extract_strided_slice %115 {offsets = [0, 128], sizes = [8, 128], strides = [1, 1]} : vector<8x384xf32> to vector<8x128xf32>
    %126 = arith.addf %124, %125 : vector<8x128xf32>
    %127 = arith.negf %126 : vector<8x128xf32>
    %128 = math.exp %127 : vector<8x128xf32>
    %cst_36 = arith.constant 1.000000e+00 : f32
    %129 = vector.broadcast %cst_36 : f32 to vector<8x128xf32>
    %130 = arith.addf %129, %128 : vector<8x128xf32>
    %131 = arith.divf %129, %130 : vector<8x128xf32>
    %132 = vector.extract_strided_slice %114 {offsets = [0, 256], sizes = [8, 128], strides = [1, 1]} : vector<8x384xf32> to vector<8x128xf32>
    %133 = vector.extract_strided_slice %115 {offsets = [0, 256], sizes = [8, 128], strides = [1, 1]} : vector<8x384xf32> to vector<8x128xf32>
    %134 = arith.addf %133, %13 : vector<8x128xf32>
    %135 = arith.mulf %123, %134 : vector<8x128xf32>
    %136 = arith.addf %132, %135 : vector<8x128xf32>
    %137 = math.tanh %136 : vector<8x128xf32>
    %cst_37 = arith.constant 1.000000e+00 : f32
    %138 = vector.broadcast %cst_37 : f32 to vector<8x128xf32>
    %139 = arith.subf %138, %131 : vector<8x128xf32>
    %140 = arith.mulf %139, %137 : vector<8x128xf32>
    %141 = arith.mulf %131, %110 : vector<8x128xf32>
    %142 = arith.addf %140, %141 : vector<8x128xf32>
    %c4_i32 = arith.constant 4 : i32
    %c8_i32_38 = arith.constant 8 : i32
    %143 = arith.muli %c4_i32, %c8_i32_38 : i32
    %144 = tpu.assume_multiple %143, 8 : i32
    %145 = arith.index_cast %144 : i32 to index
    %c0_39 = arith.constant 0 : index
    %146 = vector.load %arg7[%145, %c0_39] : memref<64x384xf32, #tpu.memory_space<vmem>>, vector<8x384xf32>
    %cst_40 = arith.constant dense<0.000000e+00> : vector<8x384xf32>
    %147 = tpu.matmul %142, %10, %cst_40 {dimension_numbers = #tpu.dot_dimension_numbers<[1], [0], [0], [1], [0, 0, 1, 1], [], []>} : vector<8x128xf32>, vector<128x384xf32>, vector<8x384xf32> -> vector<8x384xf32>
    %148 = vector.extract_strided_slice %146 {offsets = [0, 0], sizes = [8, 128], strides = [1, 1]} : vector<8x384xf32> to vector<8x128xf32>
    %149 = vector.extract_strided_slice %147 {offsets = [0, 0], sizes = [8, 128], strides = [1, 1]} : vector<8x384xf32> to vector<8x128xf32>
    %150 = arith.addf %148, %149 : vector<8x128xf32>
    %151 = arith.negf %150 : vector<8x128xf32>
    %152 = math.exp %151 : vector<8x128xf32>
    %cst_41 = arith.constant 1.000000e+00 : f32
    %153 = vector.broadcast %cst_41 : f32 to vector<8x128xf32>
    %154 = arith.addf %153, %152 : vector<8x128xf32>
    %155 = arith.divf %153, %154 : vector<8x128xf32>
    %156 = vector.extract_strided_slice %146 {offsets = [0, 128], sizes = [8, 128], strides = [1, 1]} : vector<8x384xf32> to vector<8x128xf32>
    %157 = vector.extract_strided_slice %147 {offsets = [0, 128], sizes = [8, 128], strides = [1, 1]} : vector<8x384xf32> to vector<8x128xf32>
    %158 = arith.addf %156, %157 : vector<8x128xf32>
    %159 = arith.negf %158 : vector<8x128xf32>
    %160 = math.exp %159 : vector<8x128xf32>
    %cst_42 = arith.constant 1.000000e+00 : f32
    %161 = vector.broadcast %cst_42 : f32 to vector<8x128xf32>
    %162 = arith.addf %161, %160 : vector<8x128xf32>
    %163 = arith.divf %161, %162 : vector<8x128xf32>
    %164 = vector.extract_strided_slice %146 {offsets = [0, 256], sizes = [8, 128], strides = [1, 1]} : vector<8x384xf32> to vector<8x128xf32>
    %165 = vector.extract_strided_slice %147 {offsets = [0, 256], sizes = [8, 128], strides = [1, 1]} : vector<8x384xf32> to vector<8x128xf32>
    %166 = arith.addf %165, %13 : vector<8x128xf32>
    %167 = arith.mulf %155, %166 : vector<8x128xf32>
    %168 = arith.addf %164, %167 : vector<8x128xf32>
    %169 = math.tanh %168 : vector<8x128xf32>
    %cst_43 = arith.constant 1.000000e+00 : f32
    %170 = vector.broadcast %cst_43 : f32 to vector<8x128xf32>
    %171 = arith.subf %170, %163 : vector<8x128xf32>
    %172 = arith.mulf %171, %169 : vector<8x128xf32>
    %173 = arith.mulf %163, %142 : vector<8x128xf32>
    %174 = arith.addf %172, %173 : vector<8x128xf32>
    %c5_i32 = arith.constant 5 : i32
    %c8_i32_44 = arith.constant 8 : i32
    %175 = arith.muli %c5_i32, %c8_i32_44 : i32
    %176 = tpu.assume_multiple %175, 8 : i32
    %177 = arith.index_cast %176 : i32 to index
    %c0_45 = arith.constant 0 : index
    %178 = vector.load %arg7[%177, %c0_45] : memref<64x384xf32, #tpu.memory_space<vmem>>, vector<8x384xf32>
    %cst_46 = arith.constant dense<0.000000e+00> : vector<8x384xf32>
    %179 = tpu.matmul %174, %10, %cst_46 {dimension_numbers = #tpu.dot_dimension_numbers<[1], [0], [0], [1], [0, 0, 1, 1], [], []>} : vector<8x128xf32>, vector<128x384xf32>, vector<8x384xf32> -> vector<8x384xf32>
    %180 = vector.extract_strided_slice %178 {offsets = [0, 0], sizes = [8, 128], strides = [1, 1]} : vector<8x384xf32> to vector<8x128xf32>
    %181 = vector.extract_strided_slice %179 {offsets = [0, 0], sizes = [8, 128], strides = [1, 1]} : vector<8x384xf32> to vector<8x128xf32>
    %182 = arith.addf %180, %181 : vector<8x128xf32>
    %183 = arith.negf %182 : vector<8x128xf32>
    %184 = math.exp %183 : vector<8x128xf32>
    %cst_47 = arith.constant 1.000000e+00 : f32
    %185 = vector.broadcast %cst_47 : f32 to vector<8x128xf32>
    %186 = arith.addf %185, %184 : vector<8x128xf32>
    %187 = arith.divf %185, %186 : vector<8x128xf32>
    %188 = vector.extract_strided_slice %178 {offsets = [0, 128], sizes = [8, 128], strides = [1, 1]} : vector<8x384xf32> to vector<8x128xf32>
    %189 = vector.extract_strided_slice %179 {offsets = [0, 128], sizes = [8, 128], strides = [1, 1]} : vector<8x384xf32> to vector<8x128xf32>
    %190 = arith.addf %188, %189 : vector<8x128xf32>
    %191 = arith.negf %190 : vector<8x128xf32>
    %192 = math.exp %191 : vector<8x128xf32>
    %cst_48 = arith.constant 1.000000e+00 : f32
    %193 = vector.broadcast %cst_48 : f32 to vector<8x128xf32>
    %194 = arith.addf %193, %192 : vector<8x128xf32>
    %195 = arith.divf %193, %194 : vector<8x128xf32>
    %196 = vector.extract_strided_slice %178 {offsets = [0, 256], sizes = [8, 128], strides = [1, 1]} : vector<8x384xf32> to vector<8x128xf32>
    %197 = vector.extract_strided_slice %179 {offsets = [0, 256], sizes = [8, 128], strides = [1, 1]} : vector<8x384xf32> to vector<8x128xf32>
    %198 = arith.addf %197, %13 : vector<8x128xf32>
    %199 = arith.mulf %187, %198 : vector<8x128xf32>
    %200 = arith.addf %196, %199 : vector<8x128xf32>
    %201 = math.tanh %200 : vector<8x128xf32>
    %cst_49 = arith.constant 1.000000e+00 : f32
    %202 = vector.broadcast %cst_49 : f32 to vector<8x128xf32>
    %203 = arith.subf %202, %195 : vector<8x128xf32>
    %204 = arith.mulf %203, %201 : vector<8x128xf32>
    %205 = arith.mulf %195, %174 : vector<8x128xf32>
    %206 = arith.addf %204, %205 : vector<8x128xf32>
    %c6_i32 = arith.constant 6 : i32
    %c8_i32_50 = arith.constant 8 : i32
    %207 = arith.muli %c6_i32, %c8_i32_50 : i32
    %208 = tpu.assume_multiple %207, 8 : i32
    %209 = arith.index_cast %208 : i32 to index
    %c0_51 = arith.constant 0 : index
    %210 = vector.load %arg7[%209, %c0_51] : memref<64x384xf32, #tpu.memory_space<vmem>>, vector<8x384xf32>
    %cst_52 = arith.constant dense<0.000000e+00> : vector<8x384xf32>
    %211 = tpu.matmul %206, %10, %cst_52 {dimension_numbers = #tpu.dot_dimension_numbers<[1], [0], [0], [1], [0, 0, 1, 1], [], []>} : vector<8x128xf32>, vector<128x384xf32>, vector<8x384xf32> -> vector<8x384xf32>
    %212 = vector.extract_strided_slice %210 {offsets = [0, 0], sizes = [8, 128], strides = [1, 1]} : vector<8x384xf32> to vector<8x128xf32>
    %213 = vector.extract_strided_slice %211 {offsets = [0, 0], sizes = [8, 128], strides = [1, 1]} : vector<8x384xf32> to vector<8x128xf32>
    %214 = arith.addf %212, %213 : vector<8x128xf32>
    %215 = arith.negf %214 : vector<8x128xf32>
    %216 = math.exp %215 : vector<8x128xf32>
    %cst_53 = arith.constant 1.000000e+00 : f32
    %217 = vector.broadcast %cst_53 : f32 to vector<8x128xf32>
    %218 = arith.addf %217, %216 : vector<8x128xf32>
    %219 = arith.divf %217, %218 : vector<8x128xf32>
    %220 = vector.extract_strided_slice %210 {offsets = [0, 128], sizes = [8, 128], strides = [1, 1]} : vector<8x384xf32> to vector<8x128xf32>
    %221 = vector.extract_strided_slice %211 {offsets = [0, 128], sizes = [8, 128], strides = [1, 1]} : vector<8x384xf32> to vector<8x128xf32>
    %222 = arith.addf %220, %221 : vector<8x128xf32>
    %223 = arith.negf %222 : vector<8x128xf32>
    %224 = math.exp %223 : vector<8x128xf32>
    %cst_54 = arith.constant 1.000000e+00 : f32
    %225 = vector.broadcast %cst_54 : f32 to vector<8x128xf32>
    %226 = arith.addf %225, %224 : vector<8x128xf32>
    %227 = arith.divf %225, %226 : vector<8x128xf32>
    %228 = vector.extract_strided_slice %210 {offsets = [0, 256], sizes = [8, 128], strides = [1, 1]} : vector<8x384xf32> to vector<8x128xf32>
    %229 = vector.extract_strided_slice %211 {offsets = [0, 256], sizes = [8, 128], strides = [1, 1]} : vector<8x384xf32> to vector<8x128xf32>
    %230 = arith.addf %229, %13 : vector<8x128xf32>
    %231 = arith.mulf %219, %230 : vector<8x128xf32>
    %232 = arith.addf %228, %231 : vector<8x128xf32>
    %233 = math.tanh %232 : vector<8x128xf32>
    %cst_55 = arith.constant 1.000000e+00 : f32
    %234 = vector.broadcast %cst_55 : f32 to vector<8x128xf32>
    %235 = arith.subf %234, %227 : vector<8x128xf32>
    %236 = arith.mulf %235, %233 : vector<8x128xf32>
    %237 = arith.mulf %227, %206 : vector<8x128xf32>
    %238 = arith.addf %236, %237 : vector<8x128xf32>
    %c7_i32 = arith.constant 7 : i32
    %c8_i32_56 = arith.constant 8 : i32
    %239 = arith.muli %c7_i32, %c8_i32_56 : i32
    %240 = tpu.assume_multiple %239, 8 : i32
    %241 = arith.index_cast %240 : i32 to index
    %c0_57 = arith.constant 0 : index
    %242 = vector.load %arg7[%241, %c0_57] : memref<64x384xf32, #tpu.memory_space<vmem>>, vector<8x384xf32>
    %cst_58 = arith.constant dense<0.000000e+00> : vector<8x384xf32>
    %243 = tpu.matmul %238, %10, %cst_58 {dimension_numbers = #tpu.dot_dimension_numbers<[1], [0], [0], [1], [0, 0, 1, 1], [], []>} : vector<8x128xf32>, vector<128x384xf32>, vector<8x384xf32> -> vector<8x384xf32>
    %244 = vector.extract_strided_slice %242 {offsets = [0, 0], sizes = [8, 128], strides = [1, 1]} : vector<8x384xf32> to vector<8x128xf32>
    %245 = vector.extract_strided_slice %243 {offsets = [0, 0], sizes = [8, 128], strides = [1, 1]} : vector<8x384xf32> to vector<8x128xf32>
    %246 = arith.addf %244, %245 : vector<8x128xf32>
    %247 = arith.negf %246 : vector<8x128xf32>
    %248 = math.exp %247 : vector<8x128xf32>
    %cst_59 = arith.constant 1.000000e+00 : f32
    %249 = vector.broadcast %cst_59 : f32 to vector<8x128xf32>
    %250 = arith.addf %249, %248 : vector<8x128xf32>
    %251 = arith.divf %249, %250 : vector<8x128xf32>
    %252 = vector.extract_strided_slice %242 {offsets = [0, 128], sizes = [8, 128], strides = [1, 1]} : vector<8x384xf32> to vector<8x128xf32>
    %253 = vector.extract_strided_slice %243 {offsets = [0, 128], sizes = [8, 128], strides = [1, 1]} : vector<8x384xf32> to vector<8x128xf32>
    %254 = arith.addf %252, %253 : vector<8x128xf32>
    %255 = arith.negf %254 : vector<8x128xf32>
    %256 = math.exp %255 : vector<8x128xf32>
    %cst_60 = arith.constant 1.000000e+00 : f32
    %257 = vector.broadcast %cst_60 : f32 to vector<8x128xf32>
    %258 = arith.addf %257, %256 : vector<8x128xf32>
    %259 = arith.divf %257, %258 : vector<8x128xf32>
    %260 = vector.extract_strided_slice %242 {offsets = [0, 256], sizes = [8, 128], strides = [1, 1]} : vector<8x384xf32> to vector<8x128xf32>
    %261 = vector.extract_strided_slice %243 {offsets = [0, 256], sizes = [8, 128], strides = [1, 1]} : vector<8x384xf32> to vector<8x128xf32>
    %262 = arith.addf %261, %13 : vector<8x128xf32>
    %263 = arith.mulf %251, %262 : vector<8x128xf32>
    %264 = arith.addf %260, %263 : vector<8x128xf32>
    %265 = math.tanh %264 : vector<8x128xf32>
    %cst_61 = arith.constant 1.000000e+00 : f32
    %266 = vector.broadcast %cst_61 : f32 to vector<8x128xf32>
    %267 = arith.subf %266, %259 : vector<8x128xf32>
    %268 = arith.mulf %267, %265 : vector<8x128xf32>
    %269 = arith.mulf %259, %238 : vector<8x128xf32>
    %270 = arith.addf %268, %269 : vector<8x128xf32>
    %c8_i32_62 = arith.constant 8 : i32
    %c0_63 = arith.constant 0 : index
    %c0_64 = arith.constant 0 : index
    %271 = vector.load %arg6[%c0_63, %c0_64] : memref<8x128xf32, #tpu.memory_space<vmem>>, vector<8x128xf32>
    tpu.vector_store %arg6[%c0_63, %c0_64], %270 {strides = array<i32>} : memref<8x128xf32, #tpu.memory_space<vmem>>, vector<8x128xf32>,
    return
  }
  func.func @transform_0(%arg0: i32) -> (i32, i32) {
    %c0_i32 = arith.constant 0 : i32
    %c0_i32_0 = arith.constant 0 : i32
    return %arg0, %c0_i32 : i32, i32
  }
  func.func @transform_1(%arg0: i32) -> (i32, i32) {
    %c0_i32 = arith.constant 0 : i32
    %c0_i32_0 = arith.constant 0 : i32
    %c0_i32_1 = arith.constant 0 : i32
    return %c0_i32, %c0_i32_0 : i32, i32
  }
  func.func @transform_2(%arg0: i32) -> (i32, i32) {
    %c0_i32 = arith.constant 0 : i32
    %c0_i32_0 = arith.constant 0 : i32
    %c0_i32_1 = arith.constant 0 : i32
    return %c0_i32, %c0_i32_0 : i32, i32
  }
  func.func @transform_3(%arg0: i32) -> (i32, i32) {
    %c0_i32 = arith.constant 0 : i32
    %c0_i32_0 = arith.constant 0 : i32
    %c0_i32_1 = arith.constant 0 : i32
    return %c0_i32, %c0_i32_0 : i32, i32
  }
  func.func @transform_4(%arg0: i32) -> (i32, i32) {
    %c0_i32 = arith.constant 0 : i32
    %c0_i32_0 = arith.constant 0 : i32
    %c0_i32_1 = arith.constant 0 : i32
    return %c0_i32, %c0_i32_0 : i32, i32
  }
  func.func @transform_5(%arg0: i32) -> (i32, i32) {
    %c0_i32 = arith.constant 0 : i32
    %c0_i32_0 = arith.constant 0 : i32
    %c0_i32_1 = arith.constant 0 : i32
    return %c0_i32, %c0_i32_0 : i32, i32
  }
}

</mosaic_0001>

<llo_original>
// kernel: tpu_custom_call.1
$region0: #{tpu_custom_call.1}
  #allocation0 [shape = 'u32[]', space=smem, size = 0x4, offset = 0x4, fixed_abs, tag = 'smem constant byte address 0x4 - core index']
  #allocation1 [shape = 'u32[144,128]{1,0:T(1,128)}', space=vmem, size = 0x12000, scoped, tag = 'internal scratch']
  #allocation2 [shape = 'f32[64,384]{1,0:T(8,128)}', space=vmem, size = 0x18000, scoped, tag = 'scratch operand']
  %s0 = inlined_call_operand.vmem [shape: f32[64,4], index: 0, kind: input, shape index: {}]
  %s1 = inlined_call_operand.vmem [shape: f32[4,384], index: 1, kind: input, shape index: {}]
  %s2 = inlined_call_operand.hbm [shape: f32[128,384], index: 2, kind: input, shape index: {}]
  %s3 = inlined_call_operand.vmem [shape: f32[1,384], index: 3, kind: input, shape index: {}]
  %s4 = inlined_call_operand.vmem [shape: f32[1,128], index: 4, kind: input, shape index: {}]
  %s5 = inlined_call_operand.hbm [shape: f32[8,128], index: 5, kind: output, shape index: {}]
  %s6 = sld [smem:[#allocation0]]
  $region38: #{tpu_custom_call.1} parent=0
    _
  %s8 = ssub.s32 1, %s6
  %s9 = scalar_select 0, %s8, %s6
  $region1: #{tpu_custom_call.1} parent=0
    #allocation3 [shape = 'u8[196608]{0}', space=vmem, size = 0x30000, scoped, tag = 'input window, operand 2, single buffered']
    #allocation4 [shape = 's32[1]{0}', space=sflag, size = 0x4, scoped, tag = 'scoped memory for tpu_custom_call.1']
    #allocation5 [shape = 's32[1]{0}', space=sflag, size = 0x4, scoped, tag = 'scoped memory for tpu_custom_call.1']
    #allocation6 [shape = 'u8[4096]{0}', space=vmem, size = 0x1000, scoped, tag = 'output window, operand 0, single buffered']
    %10 = vsyncpa [#allocation4], 0
    %11 = vsyncpa [#allocation5], 0
    // Predicated region
    $region2: #{tpu_custom_call.1} parent=1 // pred_check
      _
    $region3: #{tpu_custom_call.1} parent=1 // pred_check_branch
      %13 = sbr.rel (0) target = $region5
    $region4: #{tpu_custom_call.1} parent=1 // pred_region
      _
    $region5: #{tpu_custom_call.1} parent=1 // pred_fallthru
      _
    // Predicated region
    $region6: #{tpu_custom_call.1} parent=1 // pred_check
      _
    $region7: #{tpu_custom_call.1} parent=1 // pred_check_branch
      %15 = sbr.rel (0) target = $region9
    $region8: #{tpu_custom_call.1} parent=1 // pred_region
      _
    $region9: #{tpu_custom_call.1} parent=1 // pred_fallthru
      _
    // Predicated region
    $region10: #{tpu_custom_call.1} parent=1 // pred_check
      _
    $region11: #{tpu_custom_call.1} parent=1 // pred_check_branch
      %17 = sbr.rel (0) target = $region13
    $region12: #{tpu_custom_call.1} parent=1 // pred_region
      %s19 = ssub.s32 6144, 6144
      %20 = vsyncadd [#allocation4], %s19
      %s21 = sshll.u32 [#allocation3], 4
      %s22 = int_to_ptr.vmem [resolvable:$true] %s21
      %27 = dma.hbm_to_vmem [thread:$0]  %s2, 6144, %s22, [#allocation4], 384, 384, 24
    $region13: #{tpu_custom_call.1} parent=1 // pred_fallthru
      _
    // Predicated region
    $region14: #{tpu_custom_call.1} parent=1 // pred_check
      _
    $region15: #{tpu_custom_call.1} parent=1 // pred_check_branch
      %29 = sbr.rel (0) target = $region17
    $region16: #{tpu_custom_call.1} parent=1 // pred_region
      _
    $region17: #{tpu_custom_call.1} parent=1 // pred_fallthru
      _
    // Predicated region
    $region18: #{tpu_custom_call.1} parent=1 // pred_check
      _
    $region19: #{tpu_custom_call.1} parent=1 // pred_check_branch
      %31 = sbr.rel (0) target = $region21
    $region20: #{tpu_custom_call.1} parent=1 // pred_region
      _
    $region21: #{tpu_custom_call.1} parent=1 // pred_fallthru
      _
    // Predicated region
    $region22: #{tpu_custom_call.1} parent=1 // pred_check
      _
    $region23: #{tpu_custom_call.1} parent=1 // pred_check_branch
      %33 = sbr.rel (0) target = $region25
    $region24: #{tpu_custom_call.1} parent=1 // pred_region
      %34 = dma.done [#allocation4], 6144
    $region25: #{tpu_custom_call.1} parent=1 // pred_fallthru
      _
    %p35 = scmp.eq.s32.totalorder 0, 0
    // Predicated region
    $region26: #{tpu_custom_call.1} parent=1 // pred_check
      %p36 = pneg %p35
    $region27: #{tpu_custom_call.1} parent=1 // pred_check_branch
      %38 = sbr.rel (%p36) target = $region29
    $region28: #{tpu_custom_call.1} parent=1 // pred_region
      %39 = vst [vmem:[#allocation6] sm:$0xff] 0.0
    $region29: #{tpu_custom_call.1} parent=1 // pred_fallthru
      _
    %v40 = vld [vmem:[%s0] sm:$0xff]
    %v41 = vld [vmem:[%s0 + $0x8] sm:$0xff]
    %v42 = vld [vmem:[%s0 + $0x10] sm:$0xff]
    %v43 = vld [vmem:[%s0 + $0x18] sm:$0xff]
    %v44 = vld [vmem:[%s0 + $0x20] sm:$0xff]
    %v45 = vld [vmem:[%s0 + $0x28] sm:$0xff]
    %v46 = vld [vmem:[%s0 + $0x30] sm:$0xff]
    %v47 = vld [vmem:[%s0 + $0x38] sm:$0xff]
    %v48 = vld [vmem:[%s1] sm:$0xff]
    %v49 = vld [vmem:[%s1 + $0x8] sm:$0xf]
    %v50 = vld [vmem:[%s3] sm:$0x7]
    %v52 = vlaneseq
    %v53 = vshrl.u32 %v52, 7
    %v54 = vsub.s32 0, %v53
    %v55 = vrot.slane %v50, %v54
    %v56 = vlaneseq
    %v57 = vshrl.u32 %v56, 7
    %v58 = vsub.s32 1, %v57
    %v59 = vrot.slane %v50, %v58
    %v60 = vlaneseq
    %v61 = vshrl.u32 %v60, 7
    %v62 = vsub.s32 2, %v61
    %v63 = vrot.slane %v50, %v62
    %v69 = vcombine.high %v48, %v48
    %vm70 = vcmask 31744
    %v72 = vsel %vm70, %v40, 0
    %v75 = vsel %vm70, %v41, 0
    %v78 = vsel %vm70, %v42, 0
    %v81 = vsel %vm70, %v43, 0
    %v84 = vsel %vm70, %v44, 0
    %v87 = vsel %vm70, %v45, 0
    %v90 = vsel %vm70, %v46, 0
    %v93 = vsel %vm70, %v47, 0
    %vm95 = vcmask 1043456
    %v96 = vsel %vm95, %v48, 0
    %v98 = vsel %vm95, %v69, 0
    %v100 = vsel %vm95, %v49, 0
    %102 = vmatprep.subr.mxu0 %v98
    %103 = vmatpush1.msra.mxu0 %v96
    %104 = vmatprep.subr.mxu0 0.0
    %105 = vmatpush1.msra.mxu0 0.0
    %106 = vmatprep.subr.mxu0 0.0
    %107 = vmatpush1.msra.mxu0 0.0
    %108 = vmatprep.subr.mxu0 0.0
    %109 = vmatpush1.msra.mxu0 0.0
    %110 = vmatprep.subr.mxu0 0.0
    %111 = vmatpush1.msra.mxu0 0.0
    %112 = vmatprep.subr.mxu0 0.0
    %113 = vmatpush1.msra.mxu0 0.0
    %114 = vmatprep.subr.mxu0 0.0
    %115 = vmatpush1.msra.mxu0 0.0
    %116 = vmatprep.subr.mxu0 0.0
    %117 = vmatpush1.msra.mxu0 0.0
    %118 = vmatprep.subr.mxu0 0.0
    %119 = vmatpush1.msra.mxu0 0.0
    %120 = vmatprep.subr.mxu0 0.0
    %121 = vmatpush1.msra.mxu0 0.0
    %122 = vmatprep.subr.mxu0 0.0
    %123 = vmatpush1.msra.mxu0 0.0
    %124 = vmatprep.subr.mxu0 0.0
    %125 = vmatpush1.msra.mxu0 0.0
    %126 = vmatprep.subr.mxu0 0.0
    %127 = vmatpush1.msra.mxu0 0.0
    %128 = vmatprep.subr.mxu0 0.0
    %129 = vmatpush1.msra.mxu0 0.0
    %130 = vmatprep.subr.mxu0 0.0
    %131 = vmatpush1.msra.mxu0 0.0
    %132 = vmatprep.subr.mxu0 0.0
    %133 = vmatpush1.msra.mxu0 0.0
    %134 = vmatprep.subr.mxu0 0.0
    %135 = vmatpush1.msra.mxu0 0.0
    %136 = vmatprep.subr.mxu0 0.0
    %137 = vmatpush1.msra.mxu0 0.0
    %138 = vmatprep.subr.mxu0 0.0
    %139 = vmatpush1.msra.mxu0 0.0
    %140 = vmatprep.subr.mxu0 0.0
    %141 = vmatpush1.msra.mxu0 0.0
    %142 = vmatprep.subr.mxu0 0.0
    %143 = vmatpush1.msra.mxu0 0.0
    %144 = vmatprep.subr.mxu0 0.0
    %145 = vmatpush1.msra.mxu0 0.0
    %146 = vmatprep.subr.mxu0 0.0
    %147 = vmatpush1.msra.mxu0 0.0
    %148 = vmatprep.subr.mxu0 0.0
    %149 = vmatpush1.msra.mxu0 0.0
    %150 = vmatprep.subr.mxu0 0.0
    %151 = vmatpush1.msra.mxu0 0.0
    %152 = vmatprep.subr.mxu0 0.0
    %153 = vmatpush1.msra.mxu0 0.0
    %154 = vmatprep.subr.mxu0 0.0
    %155 = vmatpush1.msra.mxu0 0.0
    %156 = vmatprep.subr.mxu0 0.0
    %157 = vmatpush1.msra.mxu0 0.0
    %158 = vmatprep.subr.mxu0 0.0
    %159 = vmatpush1.msra.mxu0 0.0
    %160 = vmatprep.subr.mxu0 0.0
    %161 = vmatpush1.msra.mxu0 0.0
    %162 = vmatprep.subr.mxu0 0.0
    %163 = vmatpush1.msra.mxu0 0.0
    %164 = vmatprep.subr.mxu0 0.0
    %165 = vmatpush1.msra.mxu0 0.0
    %166 = vmatprep.mubr.f32.mxu0 0.0
    %167 = vmatmul.mubr.f32.gmra.mrb[0].mxu0 %v72
    %v168 = vpop.f32.mrb[0].mxu0
    %v169 = vadd.f32 %v55, %v168
    %v170 = vpop.f32.mrb[0].mxu0
    %v171 = vadd.f32 %v59, %v170
    %172 = vmatprep.mubr.f32.mxu0 0.0
    %173 = vmatmul.mubr.f32.gmra.mrb[0].mxu0 %v75
    %v174 = vpop.f32.mrb[0].mxu0
    %v175 = vadd.f32 %v55, %v174
    %v176 = vpop.f32.mrb[0].mxu0
    %v177 = vadd.f32 %v59, %v176
    %178 = vmatprep.mubr.f32.mxu0 0.0
    %179 = vmatmul.mubr.f32.gmra.mrb[0].mxu0 %v78
    %v180 = vpop.f32.mrb[0].mxu0
    %v181 = vadd.f32 %v55, %v180
    %v182 = vpop.f32.mrb[0].mxu0
    %v183 = vadd.f32 %v59, %v182
    %184 = vmatprep.mubr.f32.mxu0 0.0
    %185 = vmatmul.mubr.f32.gmra.mrb[0].mxu0 %v81
    %v186 = vpop.f32.mrb[0].mxu0
    %v187 = vadd.f32 %v55, %v186
    %v188 = vpop.f32.mrb[0].mxu0
    %v189 = vadd.f32 %v59, %v188
    %190 = vmatprep.mubr.f32.mxu0 0.0
    %191 = vmatmul.mubr.f32.gmra.mrb[0].mxu0 %v84
    %v192 = vpop.f32.mrb[0].mxu0
    %v193 = vadd.f32 %v55, %v192
    %v194 = vpop.f32.mrb[0].mxu0
    %v195 = vadd.f32 %v59, %v194
    %196 = vmatprep.mubr.f32.mxu0 0.0
    %197 = vmatmul.mubr.f32.gmra.mrb[0].mxu0 %v87
    %v198 = vpop.f32.mrb[0].mxu0
    %v199 = vadd.f32 %v55, %v198
    %v200 = vpop.f32.mrb[0].mxu0
    %v201 = vadd.f32 %v59, %v200
    %202 = vmatprep.mubr.f32.mxu0 0.0
    %203 = vmatmul.mubr.f32.gmra.mrb[0].mxu0 %v90
    %v204 = vpop.f32.mrb[0].mxu0
    %v205 = vadd.f32 %v55, %v204
    %v206 = vpop.f32.mrb[0].mxu0
    %v207 = vadd.f32 %v59, %v206
    %208 = vmatprep.mubr.f32.mxu0 0.0
    %209 = vmatmul.mubr.f32.gmra.mrb[0].mxu0 %v93
    %v210 = vpop.f32.mrb[0].mxu0
    %v211 = vadd.f32 %v55, %v210
    %v212 = vpop.f32.mrb[0].mxu0
    %v213 = vadd.f32 %v59, %v212
    %214 = vdwg.mxu0
    %215 = vmatprep.subr.mxu0 0.0
    %216 = vmatpush1.msra.mxu0 %v100
    %217 = vmatprep.subr.mxu0 0.0
    %218 = vmatpush1.msra.mxu0 0.0
    %219 = vmatprep.subr.mxu0 0.0
    %220 = vmatpush1.msra.mxu0 0.0
    %221 = vmatprep.subr.mxu0 0.0
    %222 = vmatpush1.msra.mxu0 0.0
    %223 = vmatprep.subr.mxu0 0.0
    %224 = vmatpush1.msra.mxu0 0.0
    %225 = vmatprep.subr.mxu0 0.0
    %226 = vmatpush1.msra.mxu0 0.0
    %227 = vmatprep.subr.mxu0 0.0
    %228 = vmatpush1.msra.mxu0 0.0
    %229 = vmatprep.subr.mxu0 0.0
    %230 = vmatpush1.msra.mxu0 0.0
    %231 = vmatprep.subr.mxu0 0.0
    %232 = vmatpush1.msra.mxu0 0.0
    %233 = vmatprep.subr.mxu0 0.0
    %234 = vmatpush1.msra.mxu0 0.0
    %235 = vmatprep.subr.mxu0 0.0
    %236 = vmatpush1.msra.mxu0 0.0
    %237 = vmatprep.subr.mxu0 0.0
    %238 = vmatpush1.msra.mxu0 0.0
    %239 = vmatprep.subr.mxu0 0.0
    %240 = vmatpush1.msra.mxu0 0.0
    %241 = vmatprep.subr.mxu0 0.0
    %242 = vmatpush1.msra.mxu0 0.0
    %243 = vmatprep.subr.mxu0 0.0
    %244 = vmatpush1.msra.mxu0 0.0
    %245 = vmatprep.subr.mxu0 0.0
    %246 = vmatpush1.msra.mxu0 0.0
    %247 = vmatprep.subr.mxu0 0.0
    %248 = vmatpush1.msra.mxu0 0.0
    %249 = vmatprep.subr.mxu0 0.0
    %250 = vmatpush1.msra.mxu0 0.0
    %251 = vmatprep.subr.mxu0 0.0
    %252 = vmatpush1.msra.mxu0 0.0
    %253 = vmatprep.subr.mxu0 0.0
    %254 = vmatpush1.msra.mxu0 0.0
    %255 = vmatprep.subr.mxu0 0.0
    %256 = vmatpush1.msra.mxu0 0.0
    %257 = vmatprep.subr.mxu0 0.0
    %258 = vmatpush1.msra.mxu0 0.0
    %259 = vmatprep.subr.mxu0 0.0
    %260 = vmatpush1.msra.mxu0 0.0
    %261 = vmatprep.subr.mxu0 0.0
    %262 = vmatpush1.msra.mxu0 0.0
    %263 = vmatprep.subr.mxu0 0.0
    %264 = vmatpush1.msra.mxu0 0.0
    %265 = vmatprep.subr.mxu0 0.0
    %266 = vmatpush1.msra.mxu0 0.0
    %267 = vmatprep.subr.mxu0 0.0
    %268 = vmatpush1.msra.mxu0 0.0
    %269 = vmatprep.subr.mxu0 0.0
    %270 = vmatpush1.msra.mxu0 0.0
    %271 = vmatprep.subr.mxu0 0.0
    %272 = vmatpush1.msra.mxu0 0.0
    %273 = vmatprep.subr.mxu0 0.0
    %274 = vmatpush1.msra.mxu0 0.0
    %275 = vmatprep.subr.mxu0 0.0
    %276 = vmatpush1.msra.mxu0 0.0
    %277 = vmatprep.subr.mxu0 0.0
    %278 = vmatpush1.msra.mxu0 0.0
    %279 = vmatprep.mubr.f32.mxu0 0.0
    %280 = vmatmul.mubr.f32.gmra.mrb[0].mxu0 %v72
    %v281 = vpop.f32.mrb[0].mxu0
    %v282 = vadd.f32 %v63, %v281
    %v283 = vpop.f32.mrb[0].mxu0
    %284 = vmatprep.mubr.f32.mxu0 0.0
    %285 = vmatmul.mubr.f32.gmra.mrb[0].mxu0 %v75
    %v286 = vpop.f32.mrb[0].mxu0
    %v287 = vadd.f32 %v63, %v286
    %v288 = vpop.f32.mrb[0].mxu0
    %289 = vmatprep.mubr.f32.mxu0 0.0
    %290 = vmatmul.mubr.f32.gmra.mrb[0].mxu0 %v78
    %v291 = vpop.f32.mrb[0].mxu0
    %v292 = vadd.f32 %v63, %v291
    %v293 = vpop.f32.mrb[0].mxu0
    %294 = vmatprep.mubr.f32.mxu0 0.0
    %295 = vmatmul.mubr.f32.gmra.mrb[0].mxu0 %v81
    %v296 = vpop.f32.mrb[0].mxu0
    %v297 = vadd.f32 %v63, %v296
    %v298 = vpop.f32.mrb[0].mxu0
    %299 = vmatprep.mubr.f32.mxu0 0.0
    %300 = vmatmul.mubr.f32.gmra.mrb[0].mxu0 %v84
    %v301 = vpop.f32.mrb[0].mxu0
    %v302 = vadd.f32 %v63, %v301
    %v303 = vpop.f32.mrb[0].mxu0
    %304 = vmatprep.mubr.f32.mxu0 0.0
    %305 = vmatmul.mubr.f32.gmra.mrb[0].mxu0 %v87
    %v306 = vpop.f32.mrb[0].mxu0
    %v307 = vadd.f32 %v63, %v306
    %v308 = vpop.f32.mrb[0].mxu0
    %309 = vmatprep.mubr.f32.mxu0 0.0
    %310 = vmatmul.mubr.f32.gmra.mrb[0].mxu0 %v90
    %v311 = vpop.f32.mrb[0].mxu0
    %v312 = vadd.f32 %v63, %v311
    %v313 = vpop.f32.mrb[0].mxu0
    %314 = vmatprep.mubr.f32.mxu0 0.0
    %315 = vmatmul.mubr.f32.gmra.mrb[0].mxu0 %v93
    %v316 = vpop.f32.mrb[0].mxu0
    %v317 = vadd.f32 %v63, %v316
    %v318 = vpop.f32.mrb[0].mxu0
    %319 = vdwg.mxu0
    %320 = vst [vmem:[#allocation2] sm:$0xff] %v169
    %321 = vst [vmem:[#allocation2 + $0x8] sm:$0xff] %v171
    %322 = vst [vmem:[#allocation2 + $0x10] sm:$0xff] %v282
    %323 = vst [vmem:[#allocation2 + $0x18] sm:$0xff] %v175
    %324 = vst [vmem:[#allocation2 + $0x20] sm:$0xff] %v177
    %325 = vst [vmem:[#allocation2 + $0x28] sm:$0xff] %v287
    %326 = vst [vmem:[#allocation2 + $0x30] sm:$0xff] %v181
    %327 = vst [vmem:[#allocation2 + $0x38] sm:$0xff] %v183
    %328 = vst [vmem:[#allocation2 + $0x40] sm:$0xff] %v292
    %329 = vst [vmem:[#allocation2 + $0x48] sm:$0xff] %v187
    %330 = vst [vmem:[#allocation2 + $0x50] sm:$0xff] %v189
    %331 = vst [vmem:[#allocation2 + $0x58] sm:$0xff] %v297
    %332 = vst [vmem:[#allocation2 + $0x60] sm:$0xff] %v193
    %333 = vst [vmem:[#allocation2 + $0x68] sm:$0xff] %v195
    %334 = vst [vmem:[#allocation2 + $0x70] sm:$0xff] %v302
    %335 = vst [vmem:[#allocation2 + $0x78] sm:$0xff] %v199
    %336 = vst [vmem:[#allocation2 + $0x80] sm:$0xff] %v201
    %337 = vst [vmem:[#allocation2 + $0x88] sm:$0xff] %v307
    %338 = vst [vmem:[#allocation2 + $0x90] sm:$0xff] %v205
    %339 = vst [vmem:[#allocation2 + $0x98] sm:$0xff] %v207
    %340 = vst [vmem:[#allocation2 + $0xa0] sm:$0xff] %v312
    %341 = vst [vmem:[#allocation2 + $0xa8] sm:$0xff] %v211
    %342 = vst [vmem:[#allocation2 + $0xb0] sm:$0xff] %v213
    %343 = vst [vmem:[#allocation2 + $0xb8] sm:$0xff] %v317
    %v344 = vld [vmem:[#allocation3] sm:$0xff]
    %v345 = vld [vmem:[#allocation3 + $0x8] sm:$0xff]
    %v346 = vld [vmem:[#allocation3 + $0x10] sm:$0xff]
    %v347 = vld [vmem:[#allocation3 + $0x18] sm:$0xff]
    %v348 = vld [vmem:[#allocation3 + $0x20] sm:$0xff]
    %v349 = vld [vmem:[#allocation3 + $0x28] sm:$0xff]
    %v350 = vld [vmem:[#allocation3 + $0x30] sm:$0xff]
    %v351 = vld [vmem:[#allocation3 + $0x38] sm:$0xff]
    %v352 = vld [vmem:[#allocation3 + $0x40] sm:$0xff]
    %v353 = vld [vmem:[#allocation3 + $0x48] sm:$0xff]
    %v354 = vld [vmem:[#allocation3 + $0x50] sm:$0xff]
    %v355 = vld [vmem:[#allocation3 + $0x58] sm:$0xff]
    %v356 = vld [vmem:[#allocation3 + $0x60] sm:$0xff]
    %v357 = vld [vmem:[#allocation3 + $0x68] sm:$0xff]
    %v358 = vld [vmem:[#allocation3 + $0x70] sm:$0xff]
    %v359 = vld [vmem:[#allocation3 + $0x78] sm:$0xff]
    %v360 = vld [vmem:[#allocation3 + $0x80] sm:$0xff]
    %v361 = vld [vmem:[#allocation3 + $0x88] sm:$0xff]
    %v362 = vld [vmem:[#allocation3 + $0x90] sm:$0xff]
    %v363 = vld [vmem:[#allocation3 + $0x98] sm:$0xff]
    %v364 = vld [vmem:[#allocation3 + $0xa0] sm:$0xff]
    %v365 = vld [vmem:[#allocation3 + $0xa8] sm:$0xff]
    %v366 = vld [vmem:[#allocation3 + $0xb0] sm:$0xff]
    %v367 = vld [vmem:[#allocation3 + $0xb8] sm:$0xff]
    %v368 = vld [vmem:[#allocation3 + $0xc0] sm:$0xff]
    %v369 = vld [vmem:[#allocation3 + $0xc8] sm:$0xff]
    %v370 = vld [vmem:[#allocation3 + $0xd0] sm:$0xff]
    %v371 = vld [vmem:[#allocation3 + $0xd8] sm:$0xff]
    %v372 = vld [vmem:[#allocation3 + $0xe0] sm:$0xff]
    %v373 = vld [vmem:[#allocation3 + $0xe8] sm:$0xff]
    %v374 = vld [vmem:[#allocation3 + $0xf0] sm:$0xff]
    %v375 = vld [vmem:[#allocation3 + $0xf8] sm:$0xff]
    %v376 = vld [vmem:[#allocation3 + $0x100] sm:$0xff]
    %v377 = vld [vmem:[#allocation3 + $0x108] sm:$0xff]
    %v378 = vld [vmem:[#allocation3 + $0x110] sm:$0xff]
    %v379 = vld [vmem:[#allocation3 + $0x118] sm:$0xff]
    %v380 = vld [vmem:[#allocation3 + $0x120] sm:$0xff]
    %v381 = vld [vmem:[#allocation3 + $0x128] sm:$0xff]
    %v382 = vld [vmem:[#allocation3 + $0x130] sm:$0xff]
    %v383 = vld [vmem:[#allocation3 + $0x138] sm:$0xff]
    %v384 = vld [vmem:[#allocation3 + $0x140] sm:$0xff]
    %v385 = vld [vmem:[#allocation3 + $0x148] sm:$0xff]
    %v386 = vld [vmem:[#allocation3 + $0x150] sm:$0xff]
    %v387 = vld [vmem:[#allocation3 + $0x158] sm:$0xff]
    %v388 = vld [vmem:[#allocation3 + $0x160] sm:$0xff]
    %v389 = vld [vmem:[#allocation3 + $0x168] sm:$0xff]
    %v390 = vld [vmem:[#allocation3 + $0x170] sm:$0xff]
    %v391 = vld [vmem:[#allocation3 + $0x178] sm:$0xff]
    %v392 = vld [vmem:[%s4] sm:$0x1]
    %v394 = vlaneseq
    %v395 = vshrl.u32 %v394, 7
    %v396 = vsub.s32 0, %v395
    %v397 = vrot.slane %v392, %v396
    %v399 = vld [vmem:[#allocation6] sm:$0xff]
    %s400 = smul.u32 0, 3
    %s401 = smul.addr %s400, 8
    %s402 = scalar_lea.vmem [#allocation2], %s401
    %v403 = vld [vmem:[%s402] sm:$0xff]
    %v404 = vld [vmem:[%s402 + $0x8] sm:$0xff]
    %v405 = vld [vmem:[%s402 + $0x10] sm:$0xff]
    %406 = vmatprep.subr.mxu0 %v345
    %407 = vmatpush1.msra.mxu0 %v344
    %408 = vmatprep.subr.mxu0 %v348
    %409 = vmatpush1.msra.mxu0 %v347
    %410 = vmatprep.subr.mxu0 %v351
    %411 = vmatpush1.msra.mxu0 %v350
    %412 = vmatprep.subr.mxu0 %v354
    %413 = vmatpush1.msra.mxu0 %v353
    %414 = vmatprep.subr.mxu0 %v357
    %415 = vmatpush1.msra.mxu0 %v356
    %416 = vmatprep.subr.mxu0 %v360
    %417 = vmatpush1.msra.mxu0 %v359
    %418 = vmatprep.subr.mxu0 %v363
    %419 = vmatpush1.msra.mxu0 %v362
    %420 = vmatprep.subr.mxu0 %v366
    %421 = vmatpush1.msra.mxu0 %v365
    %422 = vmatprep.subr.mxu0 %v369
    %423 = vmatpush1.msra.mxu0 %v368
    %424 = vmatprep.subr.mxu0 %v372
    %425 = vmatpush1.msra.mxu0 %v371
    %426 = vmatprep.subr.mxu0 %v375
    %427 = vmatpush1.msra.mxu0 %v374
    %428 = vmatprep.subr.mxu0 %v378
    %429 = vmatpush1.msra.mxu0 %v377
    %430 = vmatprep.subr.mxu0 %v381
    %431 = vmatpush1.msra.mxu0 %v380
    %432 = vmatprep.subr.mxu0 %v384
    %433 = vmatpush1.msra.mxu0 %v383
    %434 = vmatprep.subr.mxu0 %v387
    %435 = vmatpush1.msra.mxu0 %v386
    %436 = vmatprep.subr.mxu0 %v390
    %437 = vmatpush1.msra.mxu0 %v389
    %438 = vmatprep.subr.mxu0 0.0
    %439 = vmatpush1.msra.mxu0 0.0
    %440 = vmatprep.subr.mxu0 0.0
    %441 = vmatpush1.msra.mxu0 0.0
    %442 = vmatprep.subr.mxu0 0.0
    %443 = vmatpush1.msra.mxu0 0.0
    %444 = vmatprep.subr.mxu0 0.0
    %445 = vmatpush1.msra.mxu0 0.0
    %446 = vmatprep.subr.mxu0 0.0
    %447 = vmatpush1.msra.mxu0 0.0
    %448 = vmatprep.subr.mxu0 0.0
    %449 = vmatpush1.msra.mxu0 0.0
    %450 = vmatprep.subr.mxu0 0.0
    %451 = vmatpush1.msra.mxu0 0.0
    %452 = vmatprep.subr.mxu0 0.0
    %453 = vmatpush1.msra.mxu0 0.0
    %454 = vmatprep.subr.mxu0 0.0
    %455 = vmatpush1.msra.mxu0 0.0
    %456 = vmatprep.subr.mxu0 0.0
    %457 = vmatpush1.msra.mxu0 0.0
    %458 = vmatprep.subr.mxu0 0.0
    %459 = vmatpush1.msra.mxu0 0.0
    %460 = vmatprep.subr.mxu0 0.0
    %461 = vmatpush1.msra.mxu0 0.0
    %462 = vmatprep.subr.mxu0 0.0
    %463 = vmatpush1.msra.mxu0 0.0
    %464 = vmatprep.subr.mxu0 0.0
    %465 = vmatpush1.msra.mxu0 0.0
    %466 = vmatprep.subr.mxu0 0.0
    %467 = vmatpush1.msra.mxu0 0.0
    %468 = vmatprep.subr.mxu0 0.0
    %469 = vmatpush1.msra.mxu0 0.0
    %470 = vmatprep.mubr.f32.mxu0 0.0
    %471 = vmatmul.mubr.f32.gmra.mrb[0].mxu0 %v399
    %v472 = vpop.f32.mrb[0].mxu0
    %v473 = vadd.f32 0.0, %v472
    %v474 = vpop.f32.mrb[0].mxu0
    %v475 = vadd.f32 0.0, %v474
    %476 = vdwg.mxu0
    %477 = vmatprep.subr.mxu0 0.0
    %478 = vmatpush1.msra.mxu0 %v346
    %479 = vmatprep.subr.mxu0 0.0
    %480 = vmatpush1.msra.mxu0 %v349
    %481 = vmatprep.subr.mxu0 0.0
    %482 = vmatpush1.msra.mxu0 %v352
    %483 = vmatprep.subr.mxu0 0.0
    %484 = vmatpush1.msra.mxu0 %v355
    %485 = vmatprep.subr.mxu0 0.0
    %486 = vmatpush1.msra.mxu0 %v358
    %487 = vmatprep.subr.mxu0 0.0
    %488 = vmatpush1.msra.mxu0 %v361
    %489 = vmatprep.subr.mxu0 0.0
    %490 = vmatpush1.msra.mxu0 %v364
    %491 = vmatprep.subr.mxu0 0.0
    %492 = vmatpush1.msra.mxu0 %v367
    %493 = vmatprep.subr.mxu0 0.0
    %494 = vmatpush1.msra.mxu0 %v370
    %495 = vmatprep.subr.mxu0 0.0
    %496 = vmatpush1.msra.mxu0 %v373
    %497 = vmatprep.subr.mxu0 0.0
    %498 = vmatpush1.msra.mxu0 %v376
    %499 = vmatprep.subr.mxu0 0.0
    %500 = vmatpush1.msra.mxu0 %v379
    %501 = vmatprep.subr.mxu0 0.0
    %502 = vmatpush1.msra.mxu0 %v382
    %503 = vmatprep.subr.mxu0 0.0
    %504 = vmatpush1.msra.mxu0 %v385
    %505 = vmatprep.subr.mxu0 0.0
    %506 = vmatpush1.msra.mxu0 %v388
    %507 = vmatprep.subr.mxu0 0.0
    %508 = vmatpush1.msra.mxu0 %v391
    %509 = vmatprep.subr.mxu0 0.0
    %510 = vmatpush1.msra.mxu0 0.0
    %511 = vmatprep.subr.mxu0 0.0
    %512 = vmatpush1.msra.mxu0 0.0
    %513 = vmatprep.subr.mxu0 0.0
    %514 = vmatpush1.msra.mxu0 0.0
    %515 = vmatprep.subr.mxu0 0.0
    %516 = vmatpush1.msra.mxu0 0.0
    %517 = vmatprep.subr.mxu0 0.0
    %518 = vmatpush1.msra.mxu0 0.0
    %519 = vmatprep.subr.mxu0 0.0
    %520 = vmatpush1.msra.mxu0 0.0
    %521 = vmatprep.subr.mxu0 0.0
    %522 = vmatpush1.msra.mxu0 0.0
    %523 = vmatprep.subr.mxu0 0.0
    %524 = vmatpush1.msra.mxu0 0.0
    %525 = vmatprep.subr.mxu0 0.0
    %526 = vmatpush1.msra.mxu0 0.0
    %527 = vmatprep.subr.mxu0 0.0
    %528 = vmatpush1.msra.mxu0 0.0
    %529 = vmatprep.subr.mxu0 0.0
    %530 = vmatpush1.msra.mxu0 0.0
    %531 = vmatprep.subr.mxu0 0.0
    %532 = vmatpush1.msra.mxu0 0.0
    %533 = vmatprep.subr.mxu0 0.0
    %534 = vmatpush1.msra.mxu0 0.0
    %535 = vmatprep.subr.mxu0 0.0
    %536 = vmatpush1.msra.mxu0 0.0
    %537 = vmatprep.subr.mxu0 0.0
    %538 = vmatpush1.msra.mxu0 0.0
    %539 = vmatprep.subr.mxu0 0.0
    %540 = vmatpush1.msra.mxu0 0.0
    %541 = vmatprep.mubr.f32.mxu0 0.0
    %542 = vmatmul.mubr.f32.gmra.mrb[0].mxu0 %v399
    %v543 = vpop.f32.mrb[0].mxu0
    %v544 = vadd.f32 0.0, %v543
    %v545 = vpop.f32.mrb[0].mxu0
    %546 = vdwg.mxu0
    %v547 = vadd.f32 %v403, %v473
    %v548 = vxor.u32 %v547, 2147483648
    %v549 = vmul.f32 %v548, 1.442695
    %v550 = vpow.pop %v549
    %v551 = vadd.f32 %v550, 1.0
    %v552 = vrcp.pop %v551
    %v553 = vmul.f32 1.0, %v552
    %v554 = vadd.f32 %v404, %v475
    %v555 = vxor.u32 %v554, 2147483648
    %v556 = vmul.f32 %v555, 1.442695
    %v557 = vpow.pop %v556
    %v558 = vadd.f32 %v557, 1.0
    %v559 = vrcp.pop %v558
    %v560 = vmul.f32 1.0, %v559
    %v561 = vadd.f32 %v544, %v397
    %v562 = vmul.f32 %v553, %v561
    %v563 = vadd.f32 %v405, %v562
    %v564 = vtanh.pop %v563
    %v565 = vsub.f32 1.0, %v560
    %v566 = vmul.f32 %v565, %v564
    %v567 = vmul.f32 %v560, %v399
    %v568 = vadd.f32 %v566, %v567
    %s569 = smul.u32 1, 3
    %s570 = smul.addr %s569, 8
    %s571 = scalar_lea.vmem [#allocation2], %s570
    %v572 = vld [vmem:[%s571] sm:$0xff]
    %v573 = vld [vmem:[%s571 + $0x8] sm:$0xff]
    %v574 = vld [vmem:[%s571 + $0x10] sm:$0xff]
    %575 = vmatprep.subr.mxu0 %v345
    %576 = vmatpush1.msra.mxu0 %v344
    %577 = vmatprep.subr.mxu0 %v348
    %578 = vmatpush1.msra.mxu0 %v347
    %579 = vmatprep.subr.mxu0 %v351
    %580 = vmatpush1.msra.mxu0 %v350
    %581 = vmatprep.subr.mxu0 %v354
    %582 = vmatpush1.msra.mxu0 %v353
    %583 = vmatprep.subr.mxu0 %v357
    %584 = vmatpush1.msra.mxu0 %v356
    %585 = vmatprep.subr.mxu0 %v360
    %586 = vmatpush1.msra.mxu0 %v359
    %587 = vmatprep.subr.mxu0 %v363
    %588 = vmatpush1.msra.mxu0 %v362
    %589 = vmatprep.subr.mxu0 %v366
    %590 = vmatpush1.msra.mxu0 %v365
    %591 = vmatprep.subr.mxu0 %v369
    %592 = vmatpush1.msra.mxu0 %v368
    %593 = vmatprep.subr.mxu0 %v372
    %594 = vmatpush1.msra.mxu0 %v371
    %595 = vmatprep.subr.mxu0 %v375
    %596 = vmatpush1.msra.mxu0 %v374
    %597 = vmatprep.subr.mxu0 %v378
    %598 = vmatpush1.msra.mxu0 %v377
    %599 = vmatprep.subr.mxu0 %v381
    %600 = vmatpush1.msra.mxu0 %v380
    %601 = vmatprep.subr.mxu0 %v384
    %602 = vmatpush1.msra.mxu0 %v383
    %603 = vmatprep.subr.mxu0 %v387
    %604 = vmatpush1.msra.mxu0 %v386
    %605 = vmatprep.subr.mxu0 %v390
    %606 = vmatpush1.msra.mxu0 %v389
    %607 = vmatprep.subr.mxu0 0.0
    %608 = vmatpush1.msra.mxu0 0.0
    %609 = vmatprep.subr.mxu0 0.0
    %610 = vmatpush1.msra.mxu0 0.0
    %611 = vmatprep.subr.mxu0 0.0
    %612 = vmatpush1.msra.mxu0 0.0
    %613 = vmatprep.subr.mxu0 0.0
    %614 = vmatpush1.msra.mxu0 0.0
    %615 = vmatprep.subr.mxu0 0.0
    %616 = vmatpush1.msra.mxu0 0.0
    %617 = vmatprep.subr.mxu0 0.0
    %618 = vmatpush1.msra.mxu0 0.0
    %619 = vmatprep.subr.mxu0 0.0
    %620 = vmatpush1.msra.mxu0 0.0
    %621 = vmatprep.subr.mxu0 0.0
    %622 = vmatpush1.msra.mxu0 0.0
    %623 = vmatprep.subr.mxu0 0.0
    %624 = vmatpush1.msra.mxu0 0.0
    %625 = vmatprep.subr.mxu0 0.0
    %626 = vmatpush1.msra.mxu0 0.0
    %627 = vmatprep.subr.mxu0 0.0
    %628 = vmatpush1.msra.mxu0 0.0
    %629 = vmatprep.subr.mxu0 0.0
    %630 = vmatpush1.msra.mxu0 0.0
    %631 = vmatprep.subr.mxu0 0.0
    %632 = vmatpush1.msra.mxu0 0.0
    %633 = vmatprep.subr.mxu0 0.0
    %634 = vmatpush1.msra.mxu0 0.0
    %635 = vmatprep.subr.mxu0 0.0
    %636 = vmatpush1.msra.mxu0 0.0
    %637 = vmatprep.subr.mxu0 0.0
    %638 = vmatpush1.msra.mxu0 0.0
    %639 = vmatprep.mubr.f32.mxu0 0.0
    %640 = vmatmul.mubr.f32.gmra.mrb[0].mxu0 %v568
    %v641 = vpop.f32.mrb[0].mxu0
    %v642 = vadd.f32 0.0, %v641
    %v643 = vpop.f32.mrb[0].mxu0
    %v644 = vadd.f32 0.0, %v643
    %645 = vdwg.mxu0
    %646 = vmatprep.subr.mxu0 0.0
    %647 = vmatpush1.msra.mxu0 %v346
    %648 = vmatprep.subr.mxu0 0.0
    %649 = vmatpush1.msra.mxu0 %v349
    %650 = vmatprep.subr.mxu0 0.0
    %651 = vmatpush1.msra.mxu0 %v352
    %652 = vmatprep.subr.mxu0 0.0
    %653 = vmatpush1.msra.mxu0 %v355
    %654 = vmatprep.subr.mxu0 0.0
    %655 = vmatpush1.msra.mxu0 %v358
    %656 = vmatprep.subr.mxu0 0.0
    %657 = vmatpush1.msra.mxu0 %v361
    %658 = vmatprep.subr.mxu0 0.0
    %659 = vmatpush1.msra.mxu0 %v364
    %660 = vmatprep.subr.mxu0 0.0
    %661 = vmatpush1.msra.mxu0 %v367
    %662 = vmatprep.subr.mxu0 0.0
    %663 = vmatpush1.msra.mxu0 %v370
    %664 = vmatprep.subr.mxu0 0.0
    %665 = vmatpush1.msra.mxu0 %v373
    %666 = vmatprep.subr.mxu0 0.0
    %667 = vmatpush1.msra.mxu0 %v376
    %668 = vmatprep.subr.mxu0 0.0
    %669 = vmatpush1.msra.mxu0 %v379
    %670 = vmatprep.subr.mxu0 0.0
    %671 = vmatpush1.msra.mxu0 %v382
    %672 = vmatprep.subr.mxu0 0.0
    %673 = vmatpush1.msra.mxu0 %v385
    %674 = vmatprep.subr.mxu0 0.0
    %675 = vmatpush1.msra.mxu0 %v388
    %676 = vmatprep.subr.mxu0 0.0
    %677 = vmatpush1.msra.mxu0 %v391
    %678 = vmatprep.subr.mxu0 0.0
    %679 = vmatpush1.msra.mxu0 0.0
    %680 = vmatprep.subr.mxu0 0.0
    %681 = vmatpush1.msra.mxu0 0.0
    %682 = vmatprep.subr.mxu0 0.0
    %683 = vmatpush1.msra.mxu0 0.0
    %684 = vmatprep.subr.mxu0 0.0
    %685 = vmatpush1.msra.mxu0 0.0
    %686 = vmatprep.subr.mxu0 0.0
    %687 = vmatpush1.msra.mxu0 0.0
    %688 = vmatprep.subr.mxu0 0.0
    %689 = vmatpush1.msra.mxu0 0.0
    %690 = vmatprep.subr.mxu0 0.0
    %691 = vmatpush1.msra.mxu0 0.0
    %692 = vmatprep.subr.mxu0 0.0
    %693 = vmatpush1.msra.mxu0 0.0
    %694 = vmatprep.subr.mxu0 0.0
    %695 = vmatpush1.msra.mxu0 0.0
    %696 = vmatprep.subr.mxu0 0.0
    %697 = vmatpush1.msra.mxu0 0.0
    %698 = vmatprep.subr.mxu0 0.0
    %699 = vmatpush1.msra.mxu0 0.0
    %700 = vmatprep.subr.mxu0 0.0
    %701 = vmatpush1.msra.mxu0 0.0
    %702 = vmatprep.subr.mxu0 0.0
    %703 = vmatpush1.msra.mxu0 0.0
    %704 = vmatprep.subr.mxu0 0.0
    %705 = vmatpush1.msra.mxu0 0.0
    %706 = vmatprep.subr.mxu0 0.0
    %707 = vmatpush1.msra.mxu0 0.0
    %708 = vmatprep.subr.mxu0 0.0
    %709 = vmatpush1.msra.mxu0 0.0
    %710 = vmatprep.mubr.f32.mxu0 0.0
    %711 = vmatmul.mubr.f32.gmra.mrb[0].mxu0 %v568
    %v712 = vpop.f32.mrb[0].mxu0
    %v713 = vadd.f32 0.0, %v712
    %v714 = vpop.f32.mrb[0].mxu0
    %715 = vdwg.mxu0
    %v716 = vadd.f32 %v572, %v642
    %v717 = vxor.u32 %v716, 2147483648
    %v718 = vmul.f32 %v717, 1.442695
    %v719 = vpow.pop %v718
    %v720 = vadd.f32 %v719, 1.0
    %v721 = vrcp.pop %v720
    %v722 = vmul.f32 1.0, %v721
    %v723 = vadd.f32 %v573, %v644
    %v724 = vxor.u32 %v723, 2147483648
    %v725 = vmul.f32 %v724, 1.442695
    %v726 = vpow.pop %v725
    %v727 = vadd.f32 %v726, 1.0
    %v728 = vrcp.pop %v727
    %v729 = vmul.f32 1.0, %v728
    %v730 = vadd.f32 %v713, %v397
    %v731 = vmul.f32 %v722, %v730
    %v732 = vadd.f32 %v574, %v731
    %v733 = vtanh.pop %v732
    %v734 = vsub.f32 1.0, %v729
    %v735 = vmul.f32 %v734, %v733
    %v736 = vmul.f32 %v729, %v568
    %v737 = vadd.f32 %v735, %v736
    %s738 = smul.u32 2, 3
    %s739 = smul.addr %s738, 8
    %s740 = scalar_lea.vmem [#allocation2], %s739
    %v741 = vld [vmem:[%s740] sm:$0xff]
    %v742 = vld [vmem:[%s740 + $0x8] sm:$0xff]
    %v743 = vld [vmem:[%s740 + $0x10] sm:$0xff]
    %744 = vmatprep.subr.mxu0 %v345
    %745 = vmatpush1.msra.mxu0 %v344
    %746 = vmatprep.subr.mxu0 %v348
    %747 = vmatpush1.msra.mxu0 %v347
    %748 = vmatprep.subr.mxu0 %v351
    %749 = vmatpush1.msra.mxu0 %v350
    %750 = vmatprep.subr.mxu0 %v354
    %751 = vmatpush1.msra.mxu0 %v353
    %752 = vmatprep.subr.mxu0 %v357
    %753 = vmatpush1.msra.mxu0 %v356
    %754 = vmatprep.subr.mxu0 %v360
    %755 = vmatpush1.msra.mxu0 %v359
    %756 = vmatprep.subr.mxu0 %v363
    %757 = vmatpush1.msra.mxu0 %v362
    %758 = vmatprep.subr.mxu0 %v366
    %759 = vmatpush1.msra.mxu0 %v365
    %760 = vmatprep.subr.mxu0 %v369
    %761 = vmatpush1.msra.mxu0 %v368
    %762 = vmatprep.subr.mxu0 %v372
    %763 = vmatpush1.msra.mxu0 %v371
    %764 = vmatprep.subr.mxu0 %v375
    %765 = vmatpush1.msra.mxu0 %v374
    %766 = vmatprep.subr.mxu0 %v378
    %767 = vmatpush1.msra.mxu0 %v377
    %768 = vmatprep.subr.mxu0 %v381
    %769 = vmatpush1.msra.mxu0 %v380
    %770 = vmatprep.subr.mxu0 %v384
    %771 = vmatpush1.msra.mxu0 %v383
    %772 = vmatprep.subr.mxu0 %v387
    %773 = vmatpush1.msra.mxu0 %v386
    %774 = vmatprep.subr.mxu0 %v390
    %775 = vmatpush1.msra.mxu0 %v389
    %776 = vmatprep.subr.mxu0 0.0
    %777 = vmatpush1.msra.mxu0 0.0
    %778 = vmatprep.subr.mxu0 0.0
    %779 = vmatpush1.msra.mxu0 0.0
    %780 = vmatprep.subr.mxu0 0.0
    %781 = vmatpush1.msra.mxu0 0.0
    %782 = vmatprep.subr.mxu0 0.0
    %783 = vmatpush1.msra.mxu0 0.0
    %784 = vmatprep.subr.mxu0 0.0
    %785 = vmatpush1.msra.mxu0 0.0
    %786 = vmatprep.subr.mxu0 0.0
    %787 = vmatpush1.msra.mxu0 0.0
    %788 = vmatprep.subr.mxu0 0.0
    %789 = vmatpush1.msra.mxu0 0.0
    %790 = vmatprep.subr.mxu0 0.0
    %791 = vmatpush1.msra.mxu0 0.0
    %792 = vmatprep.subr.mxu0 0.0
    %793 = vmatpush1.msra.mxu0 0.0
    %794 = vmatprep.subr.mxu0 0.0
    %795 = vmatpush1.msra.mxu0 0.0
    %796 = vmatprep.subr.mxu0 0.0
    %797 = vmatpush1.msra.mxu0 0.0
    %798 = vmatprep.subr.mxu0 0.0
    %799 = vmatpush1.msra.mxu0 0.0
    %800 = vmatprep.subr.mxu0 0.0
    %801 = vmatpush1.msra.mxu0 0.0
    %802 = vmatprep.subr.mxu0 0.0
    %803 = vmatpush1.msra.mxu0 0.0
    %804 = vmatprep.subr.mxu0 0.0
    %805 = vmatpush1.msra.mxu0 0.0
    %806 = vmatprep.subr.mxu0 0.0
    %807 = vmatpush1.msra.mxu0 0.0
    %808 = vmatprep.mubr.f32.mxu0 0.0
    %809 = vmatmul.mubr.f32.gmra.mrb[0].mxu0 %v737
    %v810 = vpop.f32.mrb[0].mxu0
    %v811 = vadd.f32 0.0, %v810
    %v812 = vpop.f32.mrb[0].mxu0
    %v813 = vadd.f32 0.0, %v812
    %814 = vdwg.mxu0
    %815 = vmatprep.subr.mxu0 0.0
    %816 = vmatpush1.msra.mxu0 %v346
    %817 = vmatprep.subr.mxu0 0.0
    %818 = vmatpush1.msra.mxu0 %v349
    %819 = vmatprep.subr.mxu0 0.0
    %820 = vmatpush1.msra.mxu0 %v352
    %821 = vmatprep.subr.mxu0 0.0
    %822 = vmatpush1.msra.mxu0 %v355
    %823 = vmatprep.subr.mxu0 0.0
    %824 = vmatpush1.msra.mxu0 %v358
    %825 = vmatprep.subr.mxu0 0.0
    %826 = vmatpush1.msra.mxu0 %v361
    %827 = vmatprep.subr.mxu0 0.0
    %828 = vmatpush1.msra.mxu0 %v364
    %829 = vmatprep.subr.mxu0 0.0
    %830 = vmatpush1.msra.mxu0 %v367
    %831 = vmatprep.subr.mxu0 0.0
    %832 = vmatpush1.msra.mxu0 %v370
    %833 = vmatprep.subr.mxu0 0.0
    %834 = vmatpush1.msra.mxu0 %v373
    %835 = vmatprep.subr.mxu0 0.0
    %836 = vmatpush1.msra.mxu0 %v376
    %837 = vmatprep.subr.mxu0 0.0
    %838 = vmatpush1.msra.mxu0 %v379
    %839 = vmatprep.subr.mxu0 0.0
    %840 = vmatpush1.msra.mxu0 %v382
    %841 = vmatprep.subr.mxu0 0.0
    %842 = vmatpush1.msra.mxu0 %v385
    %843 = vmatprep.subr.mxu0 0.0
    %844 = vmatpush1.msra.mxu0 %v388
    %845 = vmatprep.subr.mxu0 0.0
    %846 = vmatpush1.msra.mxu0 %v391
    %847 = vmatprep.subr.mxu0 0.0
    %848 = vmatpush1.msra.mxu0 0.0
    %849 = vmatprep.subr.mxu0 0.0
    %850 = vmatpush1.msra.mxu0 0.0
    %851 = vmatprep.subr.mxu0 0.0
    %852 = vmatpush1.msra.mxu0 0.0
    %853 = vmatprep.subr.mxu0 0.0
    %854 = vmatpush1.msra.mxu0 0.0
    %855 = vmatprep.subr.mxu0 0.0
    %856 = vmatpush1.msra.mxu0 0.0
    %857 = vmatprep.subr.mxu0 0.0
    %858 = vmatpush1.msra.mxu0 0.0
    %859 = vmatprep.subr.mxu0 0.0
    %860 = vmatpush1.msra.mxu0 0.0
    %861 = vmatprep.subr.mxu0 0.0
    %862 = vmatpush1.msra.mxu0 0.0
    %863 = vmatprep.subr.mxu0 0.0
    %864 = vmatpush1.msra.mxu0 0.0
    %865 = vmatprep.subr.mxu0 0.0
    %866 = vmatpush1.msra.mxu0 0.0
    %867 = vmatprep.subr.mxu0 0.0
    %868 = vmatpush1.msra.mxu0 0.0
    %869 = vmatprep.subr.mxu0 0.0
    %870 = vmatpush1.msra.mxu0 0.0
    %871 = vmatprep.subr.mxu0 0.0
    %872 = vmatpush1.msra.mxu0 0.0
    %873 = vmatprep.subr.mxu0 0.0
    %874 = vmatpush1.msra.mxu0 0.0
    %875 = vmatprep.subr.mxu0 0.0
    %876 = vmatpush1.msra.mxu0 0.0
    %877 = vmatprep.subr.mxu0 0.0
    %878 = vmatpush1.msra.mxu0 0.0
    %879 = vmatprep.mubr.f32.mxu0 0.0
    %880 = vmatmul.mubr.f32.gmra.mrb[0].mxu0 %v737
    %v881 = vpop.f32.mrb[0].mxu0
    %v882 = vadd.f32 0.0, %v881
    %v883 = vpop.f32.mrb[0].mxu0
    %884 = vdwg.mxu0
    %v885 = vadd.f32 %v741, %v811
    %v886 = vxor.u32 %v885, 2147483648
    %v887 = vmul.f32 %v886, 1.442695
    %v888 = vpow.pop %v887
    %v889 = vadd.f32 %v888, 1.0
    %v890 = vrcp.pop %v889
    %v891 = vmul.f32 1.0, %v890
    %v892 = vadd.f32 %v742, %v813
    %v893 = vxor.u32 %v892, 2147483648
    %v894 = vmul.f32 %v893, 1.442695
    %v895 = vpow.pop %v894
    %v896 = vadd.f32 %v895, 1.0
    %v897 = vrcp.pop %v896
    %v898 = vmul.f32 1.0, %v897
    %v899 = vadd.f32 %v882, %v397
    %v900 = vmul.f32 %v891, %v899
    %v901 = vadd.f32 %v743, %v900
    %v902 = vtanh.pop %v901
    %v903 = vsub.f32 1.0, %v898
    %v904 = vmul.f32 %v903, %v902
    %v905 = vmul.f32 %v898, %v737
    %v906 = vadd.f32 %v904, %v905
    %s907 = smul.u32 3, 3
    %s908 = smul.addr %s907, 8
    %s909 = scalar_lea.vmem [#allocation2], %s908
    %v910 = vld [vmem:[%s909] sm:$0xff]
    %v911 = vld [vmem:[%s909 + $0x8] sm:$0xff]
    %v912 = vld [vmem:[%s909 + $0x10] sm:$0xff]
    %913 = vmatprep.subr.mxu0 %v345
    %914 = vmatpush1.msra.mxu0 %v344
    %915 = vmatprep.subr.mxu0 %v348
    %916 = vmatpush1.msra.mxu0 %v347
    %917 = vmatprep.subr.mxu0 %v351
    %918 = vmatpush1.msra.mxu0 %v350
    %919 = vmatprep.subr.mxu0 %v354
    %920 = vmatpush1.msra.mxu0 %v353
    %921 = vmatprep.subr.mxu0 %v357
    %922 = vmatpush1.msra.mxu0 %v356
    %923 = vmatprep.subr.mxu0 %v360
    %924 = vmatpush1.msra.mxu0 %v359
    %925 = vmatprep.subr.mxu0 %v363
    %926 = vmatpush1.msra.mxu0 %v362
    %927 = vmatprep.subr.mxu0 %v366
    %928 = vmatpush1.msra.mxu0 %v365
    %929 = vmatprep.subr.mxu0 %v369
    %930 = vmatpush1.msra.mxu0 %v368
    %931 = vmatprep.subr.mxu0 %v372
    %932 = vmatpush1.msra.mxu0 %v371
    %933 = vmatprep.subr.mxu0 %v375
    %934 = vmatpush1.msra.mxu0 %v374
    %935 = vmatprep.subr.mxu0 %v378
    %936 = vmatpush1.msra.mxu0 %v377
    %937 = vmatprep.subr.mxu0 %v381
    %938 = vmatpush1.msra.mxu0 %v380
    %939 = vmatprep.subr.mxu0 %v384
    %940 = vmatpush1.msra.mxu0 %v383
    %941 = vmatprep.subr.mxu0 %v387
    %942 = vmatpush1.msra.mxu0 %v386
    %943 = vmatprep.subr.mxu0 %v390
    %944 = vmatpush1.msra.mxu0 %v389
    %945 = vmatprep.subr.mxu0 0.0
    %946 = vmatpush1.msra.mxu0 0.0
    %947 = vmatprep.subr.mxu0 0.0
    %948 = vmatpush1.msra.mxu0 0.0
    %949 = vmatprep.subr.mxu0 0.0
    %950 = vmatpush1.msra.mxu0 0.0
    %951 = vmatprep.subr.mxu0 0.0
    %952 = vmatpush1.msra.mxu0 0.0
    %953 = vmatprep.subr.mxu0 0.0
    %954 = vmatpush1.msra.mxu0 0.0
    %955 = vmatprep.subr.mxu0 0.0
    %956 = vmatpush1.msra.mxu0 0.0
    %957 = vmatprep.subr.mxu0 0.0
    %958 = vmatpush1.msra.mxu0 0.0
    %959 = vmatprep.subr.mxu0 0.0
    %960 = vmatpush1.msra.mxu0 0.0
    %961 = vmatprep.subr.mxu0 0.0
    %962 = vmatpush1.msra.mxu0 0.0
    %963 = vmatprep.subr.mxu0 0.0
    %964 = vmatpush1.msra.mxu0 0.0
    %965 = vmatprep.subr.mxu0 0.0
    %966 = vmatpush1.msra.mxu0 0.0
    %967 = vmatprep.subr.mxu0 0.0
    %968 = vmatpush1.msra.mxu0 0.0
    %969 = vmatprep.subr.mxu0 0.0
    %970 = vmatpush1.msra.mxu0 0.0
    %971 = vmatprep.subr.mxu0 0.0
    %972 = vmatpush1.msra.mxu0 0.0
    %973 = vmatprep.subr.mxu0 0.0
    %974 = vmatpush1.msra.mxu0 0.0
    %975 = vmatprep.subr.mxu0 0.0
    %976 = vmatpush1.msra.mxu0 0.0
    %977 = vmatprep.mubr.f32.mxu0 0.0
    %978 = vmatmul.mubr.f32.gmra.mrb[0].mxu0 %v906
    %v979 = vpop.f32.mrb[0].mxu0
    %v980 = vadd.f32 0.0, %v979
    %v981 = vpop.f32.mrb[0].mxu0
    %v982 = vadd.f32 0.0, %v981
    %983 = vdwg.mxu0
    %984 = vmatprep.subr.mxu0 0.0
    %985 = vmatpush1.msra.mxu0 %v346
    %986 = vmatprep.subr.mxu0 0.0
    %987 = vmatpush1.msra.mxu0 %v349
    %988 = vmatprep.subr.mxu0 0.0
    %989 = vmatpush1.msra.mxu0 %v352
    %990 = vmatprep.subr.mxu0 0.0
    %991 = vmatpush1.msra.mxu0 %v355
    %992 = vmatprep.subr.mxu0 0.0
    %993 = vmatpush1.msra.mxu0 %v358
    %994 = vmatprep.subr.mxu0 0.0
    %995 = vmatpush1.msra.mxu0 %v361
    %996 = vmatprep.subr.mxu0 0.0
    %997 = vmatpush1.msra.mxu0 %v364
    %998 = vmatprep.subr.mxu0 0.0
    %999 = vmatpush1.msra.mxu0 %v367
    %1000 = vmatprep.subr.mxu0 0.0
    %1001 = vmatpush1.msra.mxu0 %v370
    %1002 = vmatprep.subr.mxu0 0.0
    %1003 = vmatpush1.msra.mxu0 %v373
    %1004 = vmatprep.subr.mxu0 0.0
    %1005 = vmatpush1.msra.mxu0 %v376
    %1006 = vmatprep.subr.mxu0 0.0
    %1007 = vmatpush1.msra.mxu0 %v379
    %1008 = vmatprep.subr.mxu0 0.0
    %1009 = vmatpush1.msra.mxu0 %v382
    %1010 = vmatprep.subr.mxu0 0.0
    %1011 = vmatpush1.msra.mxu0 %v385
    %1012 = vmatprep.subr.mxu0 0.0
    %1013 = vmatpush1.msra.mxu0 %v388
    %1014 = vmatprep.subr.mxu0 0.0
    %1015 = vmatpush1.msra.mxu0 %v391
    %1016 = vmatprep.subr.mxu0 0.0
    %1017 = vmatpush1.msra.mxu0 0.0
    %1018 = vmatprep.subr.mxu0 0.0
    %1019 = vmatpush1.msra.mxu0 0.0
    %1020 = vmatprep.subr.mxu0 0.0
    %1021 = vmatpush1.msra.mxu0 0.0
    %1022 = vmatprep.subr.mxu0 0.0
    %1023 = vmatpush1.msra.mxu0 0.0
    %1024 = vmatprep.subr.mxu0 0.0
    %1025 = vmatpush1.msra.mxu0 0.0
    %1026 = vmatprep.subr.mxu0 0.0
    %1027 = vmatpush1.msra.mxu0 0.0
    %1028 = vmatprep.subr.mxu0 0.0
    %1029 = vmatpush1.msra.mxu0 0.0
    %1030 = vmatprep.subr.mxu0 0.0
    %1031 = vmatpush1.msra.mxu0 0.0
    %1032 = vmatprep.subr.mxu0 0.0
    %1033 = vmatpush1.msra.mxu0 0.0
    %1034 = vmatprep.subr.mxu0 0.0
    %1035 = vmatpush1.msra.mxu0 0.0
    %1036 = vmatprep.subr.mxu0 0.0
    %1037 = vmatpush1.msra.mxu0 0.0
    %1038 = vmatprep.subr.mxu0 0.0
    %1039 = vmatpush1.msra.mxu0 0.0
    %1040 = vmatprep.subr.mxu0 0.0
    %1041 = vmatpush1.msra.mxu0 0.0
    %1042 = vmatprep.subr.mxu0 0.0
    %1043 = vmatpush1.msra.mxu0 0.0
    %1044 = vmatprep.subr.mxu0 0.0
    %1045 = vmatpush1.msra.mxu0 0.0
    %1046 = vmatprep.subr.mxu0 0.0
    %1047 = vmatpush1.msra.mxu0 0.0
    %1048 = vmatprep.mubr.f32.mxu0 0.0
    %1049 = vmatmul.mubr.f32.gmra.mrb[0].mxu0 %v906
    %v1050 = vpop.f32.mrb[0].mxu0
    %v1051 = vadd.f32 0.0, %v1050
    %v1052 = vpop.f32.mrb[0].mxu0
    %1053 = vdwg.mxu0
    %v1054 = vadd.f32 %v910, %v980
    %v1055 = vxor.u32 %v1054, 2147483648
    %v1056 = vmul.f32 %v1055, 1.442695
    %v1057 = vpow.pop %v1056
    %v1058 = vadd.f32 %v1057, 1.0
    %v1059 = vrcp.pop %v1058
    %v1060 = vmul.f32 1.0, %v1059
    %v1061 = vadd.f32 %v911, %v982
    %v1062 = vxor.u32 %v1061, 2147483648
    %v1063 = vmul.f32 %v1062, 1.442695
    %v1064 = vpow.pop %v1063
    %v1065 = vadd.f32 %v1064, 1.0
    %v1066 = vrcp.pop %v1065
    %v1067 = vmul.f32 1.0, %v1066
    %v1068 = vadd.f32 %v1051, %v397
    %v1069 = vmul.f32 %v1060, %v1068
    %v1070 = vadd.f32 %v912, %v1069
    %v1071 = vtanh.pop %v1070
    %v1072 = vsub.f32 1.0, %v1067
    %v1073 = vmul.f32 %v1072, %v1071
    %v1074 = vmul.f32 %v1067, %v906
    %v1075 = vadd.f32 %v1073, %v1074
    %s1076 = smul.u32 4, 3
    %s1077 = smul.addr %s1076, 8
    %s1078 = scalar_lea.vmem [#allocation2], %s1077
    %v1079 = vld [vmem:[%s1078] sm:$0xff]
    %v1080 = vld [vmem:[%s1078 + $0x8] sm:$0xff]
    %v1081 = vld [vmem:[%s1078 + $0x10] sm:$0xff]
    %1082 = vmatprep.subr.mxu0 %v345
    %1083 = vmatpush1.msra.mxu0 %v344
    %1084 = vmatprep.subr.mxu0 %v348
    %1085 = vmatpush1.msra.mxu0 %v347
    %1086 = vmatprep.subr.mxu0 %v351
    %1087 = vmatpush1.msra.mxu0 %v350
    %1088 = vmatprep.subr.mxu0 %v354
    %1089 = vmatpush1.msra.mxu0 %v353
    %1090 = vmatprep.subr.mxu0 %v357
    %1091 = vmatpush1.msra.mxu0 %v356
    %1092 = vmatprep.subr.mxu0 %v360
    %1093 = vmatpush1.msra.mxu0 %v359
    %1094 = vmatprep.subr.mxu0 %v363
    %1095 = vmatpush1.msra.mxu0 %v362
    %1096 = vmatprep.subr.mxu0 %v366
    %1097 = vmatpush1.msra.mxu0 %v365
    %1098 = vmatprep.subr.mxu0 %v369
    %1099 = vmatpush1.msra.mxu0 %v368
    %1100 = vmatprep.subr.mxu0 %v372
    %1101 = vmatpush1.msra.mxu0 %v371
    %1102 = vmatprep.subr.mxu0 %v375
    %1103 = vmatpush1.msra.mxu0 %v374
    %1104 = vmatprep.subr.mxu0 %v378
    %1105 = vmatpush1.msra.mxu0 %v377
    %1106 = vmatprep.subr.mxu0 %v381
    %1107 = vmatpush1.msra.mxu0 %v380
    %1108 = vmatprep.subr.mxu0 %v384
    %1109 = vmatpush1.msra.mxu0 %v383
    %1110 = vmatprep.subr.mxu0 %v387
    %1111 = vmatpush1.msra.mxu0 %v386
    %1112 = vmatprep.subr.mxu0 %v390
    %1113 = vmatpush1.msra.mxu0 %v389
    %1114 = vmatprep.subr.mxu0 0.0
    %1115 = vmatpush1.msra.mxu0 0.0
    %1116 = vmatprep.subr.mxu0 0.0
    %1117 = vmatpush1.msra.mxu0 0.0
    %1118 = vmatprep.subr.mxu0 0.0
    %1119 = vmatpush1.msra.mxu0 0.0
    %1120 = vmatprep.subr.mxu0 0.0
    %1121 = vmatpush1.msra.mxu0 0.0
    %1122 = vmatprep.subr.mxu0 0.0
    %1123 = vmatpush1.msra.mxu0 0.0
    %1124 = vmatprep.subr.mxu0 0.0
    %1125 = vmatpush1.msra.mxu0 0.0
    %1126 = vmatprep.subr.mxu0 0.0
    %1127 = vmatpush1.msra.mxu0 0.0
    %1128 = vmatprep.subr.mxu0 0.0
    %1129 = vmatpush1.msra.mxu0 0.0
    %1130 = vmatprep.subr.mxu0 0.0
    %1131 = vmatpush1.msra.mxu0 0.0
    %1132 = vmatprep.subr.mxu0 0.0
    %1133 = vmatpush1.msra.mxu0 0.0
    %1134 = vmatprep.subr.mxu0 0.0
    %1135 = vmatpush1.msra.mxu0 0.0
    %1136 = vmatprep.subr.mxu0 0.0
    %1137 = vmatpush1.msra.mxu0 0.0
    %1138 = vmatprep.subr.mxu0 0.0
    %1139 = vmatpush1.msra.mxu0 0.0
    %1140 = vmatprep.subr.mxu0 0.0
    %1141 = vmatpush1.msra.mxu0 0.0
    %1142 = vmatprep.subr.mxu0 0.0
    %1143 = vmatpush1.msra.mxu0 0.0
    %1144 = vmatprep.subr.mxu0 0.0
    %1145 = vmatpush1.msra.mxu0 0.0
    %1146 = vmatprep.mubr.f32.mxu0 0.0
    %1147 = vmatmul.mubr.f32.gmra.mrb[0].mxu0 %v1075
    %v1148 = vpop.f32.mrb[0].mxu0
    %v1149 = vadd.f32 0.0, %v1148
    %v1150 = vpop.f32.mrb[0].mxu0
    %v1151 = vadd.f32 0.0, %v1150
    %1152 = vdwg.mxu0
    %1153 = vmatprep.subr.mxu0 0.0
    %1154 = vmatpush1.msra.mxu0 %v346
    %1155 = vmatprep.subr.mxu0 0.0
    %1156 = vmatpush1.msra.mxu0 %v349
    %1157 = vmatprep.subr.mxu0 0.0
    %1158 = vmatpush1.msra.mxu0 %v352
    %1159 = vmatprep.subr.mxu0 0.0
    %1160 = vmatpush1.msra.mxu0 %v355
    %1161 = vmatprep.subr.mxu0 0.0
    %1162 = vmatpush1.msra.mxu0 %v358
    %1163 = vmatprep.subr.mxu0 0.0
    %1164 = vmatpush1.msra.mxu0 %v361
    %1165 = vmatprep.subr.mxu0 0.0
    %1166 = vmatpush1.msra.mxu0 %v364
    %1167 = vmatprep.subr.mxu0 0.0
    %1168 = vmatpush1.msra.mxu0 %v367
    %1169 = vmatprep.subr.mxu0 0.0
    %1170 = vmatpush1.msra.mxu0 %v370
    %1171 = vmatprep.subr.mxu0 0.0
    %1172 = vmatpush1.msra.mxu0 %v373
    %1173 = vmatprep.subr.mxu0 0.0
    %1174 = vmatpush1.msra.mxu0 %v376
    %1175 = vmatprep.subr.mxu0 0.0
    %1176 = vmatpush1.msra.mxu0 %v379
    %1177 = vmatprep.subr.mxu0 0.0
    %1178 = vmatpush1.msra.mxu0 %v382
    %1179 = vmatprep.subr.mxu0 0.0
    %1180 = vmatpush1.msra.mxu0 %v385
    %1181 = vmatprep.subr.mxu0 0.0
    %1182 = vmatpush1.msra.mxu0 %v388
    %1183 = vmatprep.subr.mxu0 0.0
    %1184 = vmatpush1.msra.mxu0 %v391
    %1185 = vmatprep.subr.mxu0 0.0
    %1186 = vmatpush1.msra.mxu0 0.0
    %1187 = vmatprep.subr.mxu0 0.0
    %1188 = vmatpush1.msra.mxu0 0.0
    %1189 = vmatprep.subr.mxu0 0.0
    %1190 = vmatpush1.msra.mxu0 0.0
    %1191 = vmatprep.subr.mxu0 0.0
    %1192 = vmatpush1.msra.mxu0 0.0
    %1193 = vmatprep.subr.mxu0 0.0
    %1194 = vmatpush1.msra.mxu0 0.0
    %1195 = vmatprep.subr.mxu0 0.0
    %1196 = vmatpush1.msra.mxu0 0.0
    %1197 = vmatprep.subr.mxu0 0.0
    %1198 = vmatpush1.msra.mxu0 0.0
    %1199 = vmatprep.subr.mxu0 0.0
    %1200 = vmatpush1.msra.mxu0 0.0
    %1201 = vmatprep.subr.mxu0 0.0
    %1202 = vmatpush1.msra.mxu0 0.0
    %1203 = vmatprep.subr.mxu0 0.0
    %1204 = vmatpush1.msra.mxu0 0.0
    %1205 = vmatprep.subr.mxu0 0.0
    %1206 = vmatpush1.msra.mxu0 0.0
    %1207 = vmatprep.subr.mxu0 0.0
    %1208 = vmatpush1.msra.mxu0 0.0
    %1209 = vmatprep.subr.mxu0 0.0
    %1210 = vmatpush1.msra.mxu0 0.0
    %1211 = vmatprep.subr.mxu0 0.0
    %1212 = vmatpush1.msra.mxu0 0.0
    %1213 = vmatprep.subr.mxu0 0.0
    %1214 = vmatpush1.msra.mxu0 0.0
    %1215 = vmatprep.subr.mxu0 0.0
    %1216 = vmatpush1.msra.mxu0 0.0
    %1217 = vmatprep.mubr.f32.mxu0 0.0
    %1218 = vmatmul.mubr.f32.gmra.mrb[0].mxu0 %v1075
    %v1219 = vpop.f32.mrb[0].mxu0
    %v1220 = vadd.f32 0.0, %v1219
    %v1221 = vpop.f32.mrb[0].mxu0
    %1222 = vdwg.mxu0
    %v1223 = vadd.f32 %v1079, %v1149
    %v1224 = vxor.u32 %v1223, 2147483648
    %v1225 = vmul.f32 %v1224, 1.442695
    %v1226 = vpow.pop %v1225
    %v1227 = vadd.f32 %v1226, 1.0
    %v1228 = vrcp.pop %v1227
    %v1229 = vmul.f32 1.0, %v1228
    %v1230 = vadd.f32 %v1080, %v1151
    %v1231 = vxor.u32 %v1230, 2147483648
    %v1232 = vmul.f32 %v1231, 1.442695
    %v1233 = vpow.pop %v1232
    %v1234 = vadd.f32 %v1233, 1.0
    %v1235 = vrcp.pop %v1234
    %v1236 = vmul.f32 1.0, %v1235
    %v1237 = vadd.f32 %v1220, %v397
    %v1238 = vmul.f32 %v1229, %v1237
    %v1239 = vadd.f32 %v1081, %v1238
    %v1240 = vtanh.pop %v1239
    %v1241 = vsub.f32 1.0, %v1236
    %v1242 = vmul.f32 %v1241, %v1240
    %v1243 = vmul.f32 %v1236, %v1075
    %v1244 = vadd.f32 %v1242, %v1243
    %s1245 = smul.u32 5, 3
    %s1246 = smul.addr %s1245, 8
    %s1247 = scalar_lea.vmem [#allocation2], %s1246
    %v1248 = vld [vmem:[%s1247] sm:$0xff]
    %v1249 = vld [vmem:[%s1247 + $0x8] sm:$0xff]
    %v1250 = vld [vmem:[%s1247 + $0x10] sm:$0xff]
    %1251 = vmatprep.subr.mxu0 %v345
    %1252 = vmatpush1.msra.mxu0 %v344
    %1253 = vmatprep.subr.mxu0 %v348
    %1254 = vmatpush1.msra.mxu0 %v347
    %1255 = vmatprep.subr.mxu0 %v351
    %1256 = vmatpush1.msra.mxu0 %v350
    %1257 = vmatprep.subr.mxu0 %v354
    %1258 = vmatpush1.msra.mxu0 %v353
    %1259 = vmatprep.subr.mxu0 %v357
    %1260 = vmatpush1.msra.mxu0 %v356
    %1261 = vmatprep.subr.mxu0 %v360
    %1262 = vmatpush1.msra.mxu0 %v359
    %1263 = vmatprep.subr.mxu0 %v363
    %1264 = vmatpush1.msra.mxu0 %v362
    %1265 = vmatprep.subr.mxu0 %v366
    %1266 = vmatpush1.msra.mxu0 %v365
    %1267 = vmatprep.subr.mxu0 %v369
    %1268 = vmatpush1.msra.mxu0 %v368
    %1269 = vmatprep.subr.mxu0 %v372
    %1270 = vmatpush1.msra.mxu0 %v371
    %1271 = vmatprep.subr.mxu0 %v375
    %1272 = vmatpush1.msra.mxu0 %v374
    %1273 = vmatprep.subr.mxu0 %v378
    %1274 = vmatpush1.msra.mxu0 %v377
    %1275 = vmatprep.subr.mxu0 %v381
    %1276 = vmatpush1.msra.mxu0 %v380
    %1277 = vmatprep.subr.mxu0 %v384
    %1278 = vmatpush1.msra.mxu0 %v383
    %1279 = vmatprep.subr.mxu0 %v387
    %1280 = vmatpush1.msra.mxu0 %v386
    %1281 = vmatprep.subr.mxu0 %v390
    %1282 = vmatpush1.msra.mxu0 %v389
    %1283 = vmatprep.subr.mxu0 0.0
    %1284 = vmatpush1.msra.mxu0 0.0
    %1285 = vmatprep.subr.mxu0 0.0
    %1286 = vmatpush1.msra.mxu0 0.0
    %1287 = vmatprep.subr.mxu0 0.0
    %1288 = vmatpush1.msra.mxu0 0.0
    %1289 = vmatprep.subr.mxu0 0.0
    %1290 = vmatpush1.msra.mxu0 0.0
    %1291 = vmatprep.subr.mxu0 0.0
    %1292 = vmatpush1.msra.mxu0 0.0
    %1293 = vmatprep.subr.mxu0 0.0
    %1294 = vmatpush1.msra.mxu0 0.0
    %1295 = vmatprep.subr.mxu0 0.0
    %1296 = vmatpush1.msra.mxu0 0.0
    %1297 = vmatprep.subr.mxu0 0.0
    %1298 = vmatpush1.msra.mxu0 0.0
    %1299 = vmatprep.subr.mxu0 0.0
    %1300 = vmatpush1.msra.mxu0 0.0
    %1301 = vmatprep.subr.mxu0 0.0
    %1302 = vmatpush1.msra.mxu0 0.0
    %1303 = vmatprep.subr.mxu0 0.0
    %1304 = vmatpush1.msra.mxu0 0.0
    %1305 = vmatprep.subr.mxu0 0.0
    %1306 = vmatpush1.msra.mxu0 0.0
    %1307 = vmatprep.subr.mxu0 0.0
    %1308 = vmatpush1.msra.mxu0 0.0
    %1309 = vmatprep.subr.mxu0 0.0
    %1310 = vmatpush1.msra.mxu0 0.0
    %1311 = vmatprep.subr.mxu0 0.0
    %1312 = vmatpush1.msra.mxu0 0.0
    %1313 = vmatprep.subr.mxu0 0.0
    %1314 = vmatpush1.msra.mxu0 0.0
    %1315 = vmatprep.mubr.f32.mxu0 0.0
    %1316 = vmatmul.mubr.f32.gmra.mrb[0].mxu0 %v1244
    %v1317 = vpop.f32.mrb[0].mxu0
    %v1318 = vadd.f32 0.0, %v1317
    %v1319 = vpop.f32.mrb[0].mxu0
    %v1320 = vadd.f32 0.0, %v1319
    %1321 = vdwg.mxu0
    %1322 = vmatprep.subr.mxu0 0.0
    %1323 = vmatpush1.msra.mxu0 %v346
    %1324 = vmatprep.subr.mxu0 0.0
    %1325 = vmatpush1.msra.mxu0 %v349
    %1326 = vmatprep.subr.mxu0 0.0
    %1327 = vmatpush1.msra.mxu0 %v352
    %1328 = vmatprep.subr.mxu0 0.0
    %1329 = vmatpush1.msra.mxu0 %v355
    %1330 = vmatprep.subr.mxu0 0.0
    %1331 = vmatpush1.msra.mxu0 %v358
    %1332 = vmatprep.subr.mxu0 0.0
    %1333 = vmatpush1.msra.mxu0 %v361
    %1334 = vmatprep.subr.mxu0 0.0
    %1335 = vmatpush1.msra.mxu0 %v364
    %1336 = vmatprep.subr.mxu0 0.0
    %1337 = vmatpush1.msra.mxu0 %v367
    %1338 = vmatprep.subr.mxu0 0.0
    %1339 = vmatpush1.msra.mxu0 %v370
    %1340 = vmatprep.subr.mxu0 0.0
    %1341 = vmatpush1.msra.mxu0 %v373
    %1342 = vmatprep.subr.mxu0 0.0
    %1343 = vmatpush1.msra.mxu0 %v376
    %1344 = vmatprep.subr.mxu0 0.0
    %1345 = vmatpush1.msra.mxu0 %v379
    %1346 = vmatprep.subr.mxu0 0.0
    %1347 = vmatpush1.msra.mxu0 %v382
    %1348 = vmatprep.subr.mxu0 0.0
    %1349 = vmatpush1.msra.mxu0 %v385
    %1350 = vmatprep.subr.mxu0 0.0
    %1351 = vmatpush1.msra.mxu0 %v388
    %1352 = vmatprep.subr.mxu0 0.0
    %1353 = vmatpush1.msra.mxu0 %v391
    %1354 = vmatprep.subr.mxu0 0.0
    %1355 = vmatpush1.msra.mxu0 0.0
    %1356 = vmatprep.subr.mxu0 0.0
    %1357 = vmatpush1.msra.mxu0 0.0
    %1358 = vmatprep.subr.mxu0 0.0
    %1359 = vmatpush1.msra.mxu0 0.0
    %1360 = vmatprep.subr.mxu0 0.0
    %1361 = vmatpush1.msra.mxu0 0.0
    %1362 = vmatprep.subr.mxu0 0.0
    %1363 = vmatpush1.msra.mxu0 0.0
    %1364 = vmatprep.subr.mxu0 0.0
    %1365 = vmatpush1.msra.mxu0 0.0
    %1366 = vmatprep.subr.mxu0 0.0
    %1367 = vmatpush1.msra.mxu0 0.0
    %1368 = vmatprep.subr.mxu0 0.0
    %1369 = vmatpush1.msra.mxu0 0.0
    %1370 = vmatprep.subr.mxu0 0.0
    %1371 = vmatpush1.msra.mxu0 0.0
    %1372 = vmatprep.subr.mxu0 0.0
    %1373 = vmatpush1.msra.mxu0 0.0
    %1374 = vmatprep.subr.mxu0 0.0
    %1375 = vmatpush1.msra.mxu0 0.0
    %1376 = vmatprep.subr.mxu0 0.0
    %1377 = vmatpush1.msra.mxu0 0.0
    %1378 = vmatprep.subr.mxu0 0.0
    %1379 = vmatpush1.msra.mxu0 0.0
    %1380 = vmatprep.subr.mxu0 0.0
    %1381 = vmatpush1.msra.mxu0 0.0
    %1382 = vmatprep.subr.mxu0 0.0
    %1383 = vmatpush1.msra.mxu0 0.0
    %1384 = vmatprep.subr.mxu0 0.0
    %1385 = vmatpush1.msra.mxu0 0.0
    %1386 = vmatprep.mubr.f32.mxu0 0.0
    %1387 = vmatmul.mubr.f32.gmra.mrb[0].mxu0 %v1244
    %v1388 = vpop.f32.mrb[0].mxu0
    %v1389 = vadd.f32 0.0, %v1388
    %v1390 = vpop.f32.mrb[0].mxu0
    %1391 = vdwg.mxu0
    %v1392 = vadd.f32 %v1248, %v1318
    %v1393 = vxor.u32 %v1392, 2147483648
    %v1394 = vmul.f32 %v1393, 1.442695
    %v1395 = vpow.pop %v1394
    %v1396 = vadd.f32 %v1395, 1.0
    %v1397 = vrcp.pop %v1396
    %v1398 = vmul.f32 1.0, %v1397
    %v1399 = vadd.f32 %v1249, %v1320
    %v1400 = vxor.u32 %v1399, 2147483648
    %v1401 = vmul.f32 %v1400, 1.442695
    %v1402 = vpow.pop %v1401
    %v1403 = vadd.f32 %v1402, 1.0
    %v1404 = vrcp.pop %v1403
    %v1405 = vmul.f32 1.0, %v1404
    %v1406 = vadd.f32 %v1389, %v397
    %v1407 = vmul.f32 %v1398, %v1406
    %v1408 = vadd.f32 %v1250, %v1407
    %v1409 = vtanh.pop %v1408
    %v1410 = vsub.f32 1.0, %v1405
    %v1411 = vmul.f32 %v1410, %v1409
    %v1412 = vmul.f32 %v1405, %v1244
    %v1413 = vadd.f32 %v1411, %v1412
    %s1414 = smul.u32 6, 3
    %s1415 = smul.addr %s1414, 8
    %s1416 = scalar_lea.vmem [#allocation2], %s1415
    %v1417 = vld [vmem:[%s1416] sm:$0xff]
    %v1418 = vld [vmem:[%s1416 + $0x8] sm:$0xff]
    %v1419 = vld [vmem:[%s1416 + $0x10] sm:$0xff]
    %1420 = vmatprep.subr.mxu0 %v345
    %1421 = vmatpush1.msra.mxu0 %v344
    %1422 = vmatprep.subr.mxu0 %v348
    %1423 = vmatpush1.msra.mxu0 %v347
    %1424 = vmatprep.subr.mxu0 %v351
    %1425 = vmatpush1.msra.mxu0 %v350
    %1426 = vmatprep.subr.mxu0 %v354
    %1427 = vmatpush1.msra.mxu0 %v353
    %1428 = vmatprep.subr.mxu0 %v357
    %1429 = vmatpush1.msra.mxu0 %v356
    %1430 = vmatprep.subr.mxu0 %v360
    %1431 = vmatpush1.msra.mxu0 %v359
    %1432 = vmatprep.subr.mxu0 %v363
    %1433 = vmatpush1.msra.mxu0 %v362
    %1434 = vmatprep.subr.mxu0 %v366
    %1435 = vmatpush1.msra.mxu0 %v365
    %1436 = vmatprep.subr.mxu0 %v369
    %1437 = vmatpush1.msra.mxu0 %v368
    %1438 = vmatprep.subr.mxu0 %v372
    %1439 = vmatpush1.msra.mxu0 %v371
    %1440 = vmatprep.subr.mxu0 %v375
    %1441 = vmatpush1.msra.mxu0 %v374
    %1442 = vmatprep.subr.mxu0 %v378
    %1443 = vmatpush1.msra.mxu0 %v377
    %1444 = vmatprep.subr.mxu0 %v381
    %1445 = vmatpush1.msra.mxu0 %v380
    %1446 = vmatprep.subr.mxu0 %v384
    %1447 = vmatpush1.msra.mxu0 %v383
    %1448 = vmatprep.subr.mxu0 %v387
    %1449 = vmatpush1.msra.mxu0 %v386
    %1450 = vmatprep.subr.mxu0 %v390
    %1451 = vmatpush1.msra.mxu0 %v389
    %1452 = vmatprep.subr.mxu0 0.0
    %1453 = vmatpush1.msra.mxu0 0.0
    %1454 = vmatprep.subr.mxu0 0.0
    %1455 = vmatpush1.msra.mxu0 0.0
    %1456 = vmatprep.subr.mxu0 0.0
    %1457 = vmatpush1.msra.mxu0 0.0
    %1458 = vmatprep.subr.mxu0 0.0
    %1459 = vmatpush1.msra.mxu0 0.0
    %1460 = vmatprep.subr.mxu0 0.0
    %1461 = vmatpush1.msra.mxu0 0.0
    %1462 = vmatprep.subr.mxu0 0.0
    %1463 = vmatpush1.msra.mxu0 0.0
    %1464 = vmatprep.subr.mxu0 0.0
    %1465 = vmatpush1.msra.mxu0 0.0
    %1466 = vmatprep.subr.mxu0 0.0
    %1467 = vmatpush1.msra.mxu0 0.0
    %1468 = vmatprep.subr.mxu0 0.0
    %1469 = vmatpush1.msra.mxu0 0.0
    %1470 = vmatprep.subr.mxu0 0.0
    %1471 = vmatpush1.msra.mxu0 0.0
    %1472 = vmatprep.subr.mxu0 0.0
    %1473 = vmatpush1.msra.mxu0 0.0
    %1474 = vmatprep.subr.mxu0 0.0
    %1475 = vmatpush1.msra.mxu0 0.0
    %1476 = vmatprep.subr.mxu0 0.0
    %1477 = vmatpush1.msra.mxu0 0.0
    %1478 = vmatprep.subr.mxu0 0.0
    %1479 = vmatpush1.msra.mxu0 0.0
    %1480 = vmatprep.subr.mxu0 0.0
    %1481 = vmatpush1.msra.mxu0 0.0
    %1482 = vmatprep.subr.mxu0 0.0
    %1483 = vmatpush1.msra.mxu0 0.0
    %1484 = vmatprep.mubr.f32.mxu0 0.0
    %1485 = vmatmul.mubr.f32.gmra.mrb[0].mxu0 %v1413
    %v1486 = vpop.f32.mrb[0].mxu0
    %v1487 = vadd.f32 0.0, %v1486
    %v1488 = vpop.f32.mrb[0].mxu0
    %v1489 = vadd.f32 0.0, %v1488
    %1490 = vdwg.mxu0
    %1491 = vmatprep.subr.mxu0 0.0
    %1492 = vmatpush1.msra.mxu0 %v346
    %1493 = vmatprep.subr.mxu0 0.0
    %1494 = vmatpush1.msra.mxu0 %v349
    %1495 = vmatprep.subr.mxu0 0.0
    %1496 = vmatpush1.msra.mxu0 %v352
    %1497 = vmatprep.subr.mxu0 0.0
    %1498 = vmatpush1.msra.mxu0 %v355
    %1499 = vmatprep.subr.mxu0 0.0
    %1500 = vmatpush1.msra.mxu0 %v358
    %1501 = vmatprep.subr.mxu0 0.0
    %1502 = vmatpush1.msra.mxu0 %v361
    %1503 = vmatprep.subr.mxu0 0.0
    %1504 = vmatpush1.msra.mxu0 %v364
    %1505 = vmatprep.subr.mxu0 0.0
    %1506 = vmatpush1.msra.mxu0 %v367
    %1507 = vmatprep.subr.mxu0 0.0
    %1508 = vmatpush1.msra.mxu0 %v370
    %1509 = vmatprep.subr.mxu0 0.0
    %1510 = vmatpush1.msra.mxu0 %v373
    %1511 = vmatprep.subr.mxu0 0.0
    %1512 = vmatpush1.msra.mxu0 %v376
    %1513 = vmatprep.subr.mxu0 0.0
    %1514 = vmatpush1.msra.mxu0 %v379
    %1515 = vmatprep.subr.mxu0 0.0
    %1516 = vmatpush1.msra.mxu0 %v382
    %1517 = vmatprep.subr.mxu0 0.0
    %1518 = vmatpush1.msra.mxu0 %v385
    %1519 = vmatprep.subr.mxu0 0.0
    %1520 = vmatpush1.msra.mxu0 %v388
    %1521 = vmatprep.subr.mxu0 0.0
    %1522 = vmatpush1.msra.mxu0 %v391
    %1523 = vmatprep.subr.mxu0 0.0
    %1524 = vmatpush1.msra.mxu0 0.0
    %1525 = vmatprep.subr.mxu0 0.0
    %1526 = vmatpush1.msra.mxu0 0.0
    %1527 = vmatprep.subr.mxu0 0.0
    %1528 = vmatpush1.msra.mxu0 0.0
    %1529 = vmatprep.subr.mxu0 0.0
    %1530 = vmatpush1.msra.mxu0 0.0
    %1531 = vmatprep.subr.mxu0 0.0
    %1532 = vmatpush1.msra.mxu0 0.0
    %1533 = vmatprep.subr.mxu0 0.0
    %1534 = vmatpush1.msra.mxu0 0.0
    %1535 = vmatprep.subr.mxu0 0.0
    %1536 = vmatpush1.msra.mxu0 0.0
    %1537 = vmatprep.subr.mxu0 0.0
    %1538 = vmatpush1.msra.mxu0 0.0
    %1539 = vmatprep.subr.mxu0 0.0
    %1540 = vmatpush1.msra.mxu0 0.0
    %1541 = vmatprep.subr.mxu0 0.0
    %1542 = vmatpush1.msra.mxu0 0.0
    %1543 = vmatprep.subr.mxu0 0.0
    %1544 = vmatpush1.msra.mxu0 0.0
    %1545 = vmatprep.subr.mxu0 0.0
    %1546 = vmatpush1.msra.mxu0 0.0
    %1547 = vmatprep.subr.mxu0 0.0
    %1548 = vmatpush1.msra.mxu0 0.0
    %1549 = vmatprep.subr.mxu0 0.0
    %1550 = vmatpush1.msra.mxu0 0.0
    %1551 = vmatprep.subr.mxu0 0.0
    %1552 = vmatpush1.msra.mxu0 0.0
    %1553 = vmatprep.subr.mxu0 0.0
    %1554 = vmatpush1.msra.mxu0 0.0
    %1555 = vmatprep.mubr.f32.mxu0 0.0
    %1556 = vmatmul.mubr.f32.gmra.mrb[0].mxu0 %v1413
    %v1557 = vpop.f32.mrb[0].mxu0
    %v1558 = vadd.f32 0.0, %v1557
    %v1559 = vpop.f32.mrb[0].mxu0
    %1560 = vdwg.mxu0
    %v1561 = vadd.f32 %v1417, %v1487
    %v1562 = vxor.u32 %v1561, 2147483648
    %v1563 = vmul.f32 %v1562, 1.442695
    %v1564 = vpow.pop %v1563
    %v1565 = vadd.f32 %v1564, 1.0
    %v1566 = vrcp.pop %v1565
    %v1567 = vmul.f32 1.0, %v1566
    %v1568 = vadd.f32 %v1418, %v1489
    %v1569 = vxor.u32 %v1568, 2147483648
    %v1570 = vmul.f32 %v1569, 1.442695
    %v1571 = vpow.pop %v1570
    %v1572 = vadd.f32 %v1571, 1.0
    %v1573 = vrcp.pop %v1572
    %v1574 = vmul.f32 1.0, %v1573
    %v1575 = vadd.f32 %v1558, %v397
    %v1576 = vmul.f32 %v1567, %v1575
    %v1577 = vadd.f32 %v1419, %v1576
    %v1578 = vtanh.pop %v1577
    %v1579 = vsub.f32 1.0, %v1574
    %v1580 = vmul.f32 %v1579, %v1578
    %v1581 = vmul.f32 %v1574, %v1413
    %v1582 = vadd.f32 %v1580, %v1581
    %s1583 = smul.u32 7, 3
    %s1584 = smul.addr %s1583, 8
    %s1585 = scalar_lea.vmem [#allocation2], %s1584
    %v1586 = vld [vmem:[%s1585] sm:$0xff]
    %v1587 = vld [vmem:[%s1585 + $0x8] sm:$0xff]
    %v1588 = vld [vmem:[%s1585 + $0x10] sm:$0xff]
    %1589 = vmatprep.subr.mxu0 %v345
    %1590 = vmatpush1.msra.mxu0 %v344
    %1591 = vmatprep.subr.mxu0 %v348
    %1592 = vmatpush1.msra.mxu0 %v347
    %1593 = vmatprep.subr.mxu0 %v351
    %1594 = vmatpush1.msra.mxu0 %v350
    %1595 = vmatprep.subr.mxu0 %v354
    %1596 = vmatpush1.msra.mxu0 %v353
    %1597 = vmatprep.subr.mxu0 %v357
    %1598 = vmatpush1.msra.mxu0 %v356
    %1599 = vmatprep.subr.mxu0 %v360
    %1600 = vmatpush1.msra.mxu0 %v359
    %1601 = vmatprep.subr.mxu0 %v363
    %1602 = vmatpush1.msra.mxu0 %v362
    %1603 = vmatprep.subr.mxu0 %v366
    %1604 = vmatpush1.msra.mxu0 %v365
    %1605 = vmatprep.subr.mxu0 %v369
    %1606 = vmatpush1.msra.mxu0 %v368
    %1607 = vmatprep.subr.mxu0 %v372
    %1608 = vmatpush1.msra.mxu0 %v371
    %1609 = vmatprep.subr.mxu0 %v375
    %1610 = vmatpush1.msra.mxu0 %v374
    %1611 = vmatprep.subr.mxu0 %v378
    %1612 = vmatpush1.msra.mxu0 %v377
    %1613 = vmatprep.subr.mxu0 %v381
    %1614 = vmatpush1.msra.mxu0 %v380
    %1615 = vmatprep.subr.mxu0 %v384
    %1616 = vmatpush1.msra.mxu0 %v383
    %1617 = vmatprep.subr.mxu0 %v387
    %1618 = vmatpush1.msra.mxu0 %v386
    %1619 = vmatprep.subr.mxu0 %v390
    %1620 = vmatpush1.msra.mxu0 %v389
    %1621 = vmatprep.subr.mxu0 0.0
    %1622 = vmatpush1.msra.mxu0 0.0
    %1623 = vmatprep.subr.mxu0 0.0
    %1624 = vmatpush1.msra.mxu0 0.0
    %1625 = vmatprep.subr.mxu0 0.0
    %1626 = vmatpush1.msra.mxu0 0.0
    %1627 = vmatprep.subr.mxu0 0.0
    %1628 = vmatpush1.msra.mxu0 0.0
    %1629 = vmatprep.subr.mxu0 0.0
    %1630 = vmatpush1.msra.mxu0 0.0
    %1631 = vmatprep.subr.mxu0 0.0
    %1632 = vmatpush1.msra.mxu0 0.0
    %1633 = vmatprep.subr.mxu0 0.0
    %1634 = vmatpush1.msra.mxu0 0.0
    %1635 = vmatprep.subr.mxu0 0.0
    %1636 = vmatpush1.msra.mxu0 0.0
    %1637 = vmatprep.subr.mxu0 0.0
    %1638 = vmatpush1.msra.mxu0 0.0
    %1639 = vmatprep.subr.mxu0 0.0
    %1640 = vmatpush1.msra.mxu0 0.0
    %1641 = vmatprep.subr.mxu0 0.0
    %1642 = vmatpush1.msra.mxu0 0.0
    %1643 = vmatprep.subr.mxu0 0.0
    %1644 = vmatpush1.msra.mxu0 0.0
    %1645 = vmatprep.subr.mxu0 0.0
    %1646 = vmatpush1.msra.mxu0 0.0
    %1647 = vmatprep.subr.mxu0 0.0
    %1648 = vmatpush1.msra.mxu0 0.0
    %1649 = vmatprep.subr.mxu0 0.0
    %1650 = vmatpush1.msra.mxu0 0.0
    %1651 = vmatprep.subr.mxu0 0.0
    %1652 = vmatpush1.msra.mxu0 0.0
    %1653 = vmatprep.mubr.f32.mxu0 0.0
    %1654 = vmatmul.mubr.f32.gmra.mrb[0].mxu0 %v1582
    %v1655 = vpop.f32.mrb[0].mxu0
    %v1656 = vadd.f32 0.0, %v1655
    %v1657 = vpop.f32.mrb[0].mxu0
    %v1658 = vadd.f32 0.0, %v1657
    %1659 = vdwg.mxu0
    %1660 = vmatprep.subr.mxu0 0.0
    %1661 = vmatpush1.msra.mxu0 %v346
    %1662 = vmatprep.subr.mxu0 0.0
    %1663 = vmatpush1.msra.mxu0 %v349
    %1664 = vmatprep.subr.mxu0 0.0
    %1665 = vmatpush1.msra.mxu0 %v352
    %1666 = vmatprep.subr.mxu0 0.0
    %1667 = vmatpush1.msra.mxu0 %v355
    %1668 = vmatprep.subr.mxu0 0.0
    %1669 = vmatpush1.msra.mxu0 %v358
    %1670 = vmatprep.subr.mxu0 0.0
    %1671 = vmatpush1.msra.mxu0 %v361
    %1672 = vmatprep.subr.mxu0 0.0
    %1673 = vmatpush1.msra.mxu0 %v364
    %1674 = vmatprep.subr.mxu0 0.0
    %1675 = vmatpush1.msra.mxu0 %v367
    %1676 = vmatprep.subr.mxu0 0.0
    %1677 = vmatpush1.msra.mxu0 %v370
    %1678 = vmatprep.subr.mxu0 0.0
    %1679 = vmatpush1.msra.mxu0 %v373
    %1680 = vmatprep.subr.mxu0 0.0
    %1681 = vmatpush1.msra.mxu0 %v376
    %1682 = vmatprep.subr.mxu0 0.0
    %1683 = vmatpush1.msra.mxu0 %v379
    %1684 = vmatprep.subr.mxu0 0.0
    %1685 = vmatpush1.msra.mxu0 %v382
    %1686 = vmatprep.subr.mxu0 0.0
    %1687 = vmatpush1.msra.mxu0 %v385
    %1688 = vmatprep.subr.mxu0 0.0
    %1689 = vmatpush1.msra.mxu0 %v388
    %1690 = vmatprep.subr.mxu0 0.0
    %1691 = vmatpush1.msra.mxu0 %v391
    %1692 = vmatprep.subr.mxu0 0.0
    %1693 = vmatpush1.msra.mxu0 0.0
    %1694 = vmatprep.subr.mxu0 0.0
    %1695 = vmatpush1.msra.mxu0 0.0
    %1696 = vmatprep.subr.mxu0 0.0
    %1697 = vmatpush1.msra.mxu0 0.0
    %1698 = vmatprep.subr.mxu0 0.0
    %1699 = vmatpush1.msra.mxu0 0.0
    %1700 = vmatprep.subr.mxu0 0.0
    %1701 = vmatpush1.msra.mxu0 0.0
    %1702 = vmatprep.subr.mxu0 0.0
    %1703 = vmatpush1.msra.mxu0 0.0
    %1704 = vmatprep.subr.mxu0 0.0
    %1705 = vmatpush1.msra.mxu0 0.0
    %1706 = vmatprep.subr.mxu0 0.0
    %1707 = vmatpush1.msra.mxu0 0.0
    %1708 = vmatprep.subr.mxu0 0.0
    %1709 = vmatpush1.msra.mxu0 0.0
    %1710 = vmatprep.subr.mxu0 0.0
    %1711 = vmatpush1.msra.mxu0 0.0
    %1712 = vmatprep.subr.mxu0 0.0
    %1713 = vmatpush1.msra.mxu0 0.0
    %1714 = vmatprep.subr.mxu0 0.0
    %1715 = vmatpush1.msra.mxu0 0.0
    %1716 = vmatprep.subr.mxu0 0.0
    %1717 = vmatpush1.msra.mxu0 0.0
    %1718 = vmatprep.subr.mxu0 0.0
    %1719 = vmatpush1.msra.mxu0 0.0
    %1720 = vmatprep.subr.mxu0 0.0
    %1721 = vmatpush1.msra.mxu0 0.0
    %1722 = vmatprep.subr.mxu0 0.0
    %1723 = vmatpush1.msra.mxu0 0.0
    %1724 = vmatprep.mubr.f32.mxu0 0.0
    %1725 = vmatmul.mubr.f32.gmra.mrb[0].mxu0 %v1582
    %v1726 = vpop.f32.mrb[0].mxu0
    %v1727 = vadd.f32 0.0, %v1726
    %v1728 = vpop.f32.mrb[0].mxu0
    %1729 = vdwg.mxu0
    %v1730 = vadd.f32 %v1586, %v1656
    %v1731 = vxor.u32 %v1730, 2147483648
    %v1732 = vmul.f32 %v1731, 1.442695
    %v1733 = vpow.pop %v1732
    %v1734 = vadd.f32 %v1733, 1.0
    %v1735 = vrcp.pop %v1734
    %v1736 = vmul.f32 1.0, %v1735
    %v1737 = vadd.f32 %v1587, %v1658
    %v1738 = vxor.u32 %v1737, 2147483648
    %v1739 = vmul.f32 %v1738, 1.442695
    %v1740 = vpow.pop %v1739
    %v1741 = vadd.f32 %v1740, 1.0
    %v1742 = vrcp.pop %v1741
    %v1743 = vmul.f32 1.0, %v1742
    %v1744 = vadd.f32 %v1727, %v397
    %v1745 = vmul.f32 %v1736, %v1744
    %v1746 = vadd.f32 %v1588, %v1745
    %v1747 = vtanh.pop %v1746
    %v1748 = vsub.f32 1.0, %v1743
    %v1749 = vmul.f32 %v1748, %v1747
    %v1750 = vmul.f32 %v1743, %v1582
    %v1751 = vadd.f32 %v1749, %v1750
    %1752 = vst [vmem:[#allocation6] sm:$0xff] %v1751
    // Predicated region
    $region30: #{tpu_custom_call.1} parent=1 // pred_check
      _
    $region31: #{tpu_custom_call.1} parent=1 // pred_check_branch
      %1754 = sbr.rel (0) target = $region33
    $region32: #{tpu_custom_call.1} parent=1 // pred_region
      %s1756 = ssub.s32 128, 128
      %1757 = vsyncadd [#allocation5], %s1756
      %s1759 = sshll.u32 [#allocation6], 4
      %s1760 = int_to_ptr.vmem [resolvable:$true] %s1759
      %1762 = dma.vmem_to_hbm [thread:$0]  %s1760, 128, %s5, [#allocation5]
    $region33: #{tpu_custom_call.1} parent=1 // pred_fallthru
      _
    // Predicated region
    $region34: #{tpu_custom_call.1} parent=1 // pred_check
      _
    $region35: #{tpu_custom_call.1} parent=1 // pred_check_branch
      %1764 = sbr.rel (0) target = $region37
    $region36: #{tpu_custom_call.1} parent=1 // pred_region
      %1765 = dma.done [#allocation5], 128
    $region37: #{tpu_custom_call.1} parent=1 // pred_fallthru
      _
    %1766 = vsyncpa [#allocation4], 1
    %1767 = vsyncpa [#allocation5], 1

</llo_original>
